<compile_context>
chip_gen: v7x
topology: tpu7x:2x2x1
jax: 0.10.0
libtpu: 0.0.40
codegen_flags: <defaults>
</compile_context>

<pallas_src>
import functools

import jax
import jax.numpy as jnp
from jax import lax
from jax.experimental import pallas as pl
from jax.experimental.pallas import tpu as pltpu


def _vae_kernel(b_real, latent,
                x_ref, x2_ref, eps_ref,
                w1_ref, b1_ref, wml_ref, bml_ref,
                w2_ref, b2_ref, wout_ref, bout_ref,
                scal_ref, rx2_ref, rx_ref):
    x = x_ref[...]                       # (Bp, D) f32 (rows >= b_real are zero pad)
    x2 = x2_ref[...]
    bp = x.shape[0]                      # static
    padded = (bp != b_real)              # Python bool -> resolved at trace time

    xb = x.astype(jnp.bfloat16)

    # ---- encoder MLP (bf16 operands, f32 accumulate) ----
    h = jnp.dot(xb, w1_ref[...], preferred_element_type=jnp.float32) + b1_ref[...]
    h = jnp.maximum(h, 0.0)

    # fused mu / log_var head: one (hidden, 2*latent) matmul, then slice
    ml = jnp.dot(h.astype(jnp.bfloat16), wml_ref[...],
                 preferred_element_type=jnp.float32) + bml_ref[...]
    mu = ml[:, :latent]
    log_var = ml[:, latent:]
    std = jnp.exp(0.5 * log_var)

    # ---- reparameterization: z = mu + eps * std ----
    z = mu + eps_ref[...] * std

    # ---- decoder MLP ----
    hd = jnp.dot(z.astype(jnp.bfloat16), w2_ref[...],
                 preferred_element_type=jnp.float32) + b2_ref[...]
    hd = jnp.maximum(hd, 0.0)
    recon_x = jnp.dot(hd.astype(jnp.bfloat16), wout_ref[...],
                      preferred_element_type=jnp.float32) + bout_ref[...]

    rx_ref[...] = recon_x
    rx2_ref[...] = 0.1 * recon_x + 0.9 * x

    diff = recon_x - x2

    # ---- fused D-wide row reductions: one lane-reduce over (3*Bp, D) ----
    # rows [0,Bp)   -> ||x_i||^2        (InfoNCE)
    # rows [Bp,2Bp) -> ||recon_x_j||^2  (InfoNCE)
    # rows [2Bp,3Bp)-> sum_d diff^2     (reconstruction loss, *0.5 below)
    stacked = jnp.concatenate([x * x, recon_x * recon_x, diff * diff], axis=0)
    row_sums = jnp.sum(stacked, axis=-1, keepdims=True)                  # (3Bp,1)
    x_sq = row_sums[:bp]
    r_sq = row_sums[bp:2 * bp]
    recon_loss_i = 0.5 * row_sums[2 * bp:]

    # ---- KLD per sample (exp(log_var) == std*std, reuse EUP result) ----
    kld_i = -0.5 * jnp.sum(1.0 + log_var - mu * mu - std * std,
                           axis=-1, keepdims=True)                       # (Bp,1)

    inv_b = 1.0 / float(b_real)
    if padded:
        row_valid = lax.broadcasted_iota(jnp.int32, (bp, 1), 0) < b_real  # (Bp,1)
        rv_f = row_valid.astype(jnp.float32)
        recon_loss_mean = jnp.sum(recon_loss_i * rv_f) * inv_b
        kld_mean = jnp.sum(kld_i * rv_f) * inv_b
    else:
        recon_loss_mean = jnp.sum(recon_loss_i) * inv_b
        kld_mean = jnp.sum(kld_i) * inv_b
    loss_mean = recon_loss_mean + kld_mean

    # ---- InfoNCE(recon_x, x) in MXU form ----
    # score[i, j] = -||x_i - r_j||^2 / 20
    #            = -(||x_i||^2 + ||r_j||^2 - 2 x_i . r_j) / 20
    # Cross term in f32 (tiny matmul, keeps distances exact) and contracted on
    # the last dim of BOTH operands -> no recon_x^T relayout before the MXU.
    xr = lax.dot_general(x, recon_x, (((1,), (1,)), ((), ())),
                         preferred_element_type=jnp.float32)              # (Bp,Bp)
    score = -(x_sq + jnp.transpose(r_sq) - 2.0 * xr) * (1.0 / 20.0)       # (Bp,Bp)

    # mask padded columns out of the logsumexp, padded rows out of the mean
    if padded:
        col_valid = lax.broadcasted_iota(jnp.int32, (1, bp), 1) < b_real  # (1,Bp)
        score = jnp.where(col_valid, score, jnp.float32(-1e30))
    m = jnp.max(score, axis=1, keepdims=True)                             # (Bp,1)
    lse = m + jnp.log(jnp.sum(jnp.exp(score - m), axis=1, keepdims=True)) # (Bp,1)
    if padded:
        recon_loss_2 = -jnp.sum(lse * rv_f) * inv_b
    else:
        recon_loss_2 = -jnp.sum(lse) * inv_b

    # ---- packed scalar outputs: [loss, recon_loss, kld, recon_loss_2] ----
    scal_ref[0] = loss_mean
    scal_ref[1] = recon_loss_mean
    scal_ref[2] = kld_mean
    scal_ref[3] = recon_loss_2


def make_params(key, d_in, hidden, latent):
    """Deterministic synthetic MLP encoder/decoder parameters (f32 master copy)."""
    ks = jax.random.split(key, 6)
    s = 0.05
    w1 = s * jax.random.normal(ks[0], (d_in, hidden), jnp.float32)
    b1 = jnp.zeros((1, hidden), jnp.float32)
    wmu = s * jax.random.normal(ks[1], (hidden, latent), jnp.float32)
    bmu = jnp.zeros((1, latent), jnp.float32)
    wlv = s * jax.random.normal(ks[2], (hidden, latent), jnp.float32)
    blv = jnp.zeros((1, latent), jnp.float32)
    w2 = s * jax.random.normal(ks[3], (latent, hidden), jnp.float32)
    b2 = jnp.zeros((1, hidden), jnp.float32)
    wout = s * jax.random.normal(ks[4], (hidden, d_in), jnp.float32)
    bout = jnp.zeros((1, d_in), jnp.float32)
    return (w1, b1, wmu, bmu, wlv, blv, w2, b2, wout, bout)


def prepare_params(params):
    """One-time parameter preparation (hoisted out of the per-call path):
    fuse the mu/log_var heads into a single (hidden, 2*latent) weight/bias and
    pre-cast all matmul weights to bfloat16 (biases stay f32; they are added
    to f32 accumulators)."""
    (w1, b1, wmu, bmu, wlv, blv, w2, b2, wout, bout) = params
    wml = jnp.concatenate([wmu, wlv], axis=1)
    bml = jnp.concatenate([bmu, blv], axis=1)
    return (w1.astype(jnp.bfloat16), b1,
            wml.astype(jnp.bfloat16), bml,
            w2.astype(jnp.bfloat16), b2,
            wout.astype(jnp.bfloat16), bout)


def vae_forward(x_nchw, x2_nchw, eps, prepared_params):
    """Flatten NCHW -> (B, D), pad batch to a 16-row multiple (full bf16
    packed sublane groups), run the fused Pallas kernel, slice/reshape back."""
    B = x_nchw.shape[0]
    D = x_nchw.shape[1] * x_nchw.shape[2] * x_nchw.shape[3]
    latent = eps.shape[1]

    x = x_nchw.reshape(B, D).astype(jnp.float32)
    x2 = x2_nchw.reshape(B, D).astype(jnp.float32)
    eps = eps.astype(jnp.float32)

    # pad batch to a multiple of 16 rows; padded rows are masked in-kernel
    B_pad = max(16, ((B + 15) // 16) * 16)
    pad = B_pad - B
    if pad:
        x = jnp.pad(x, ((0, pad), (0, 0)))
        x2 = jnp.pad(x2, ((0, pad), (0, 0)))
        eps = jnp.pad(eps, ((0, pad), (0, 0)))

    (w1_b, b1, wml_b, bml, w2_b, b2, wout_b, bout) = prepared_params

    vspec = pl.BlockSpec(memory_space=pltpu.MemorySpace.VMEM)
    sspec = pl.BlockSpec(memory_space=pltpu.MemorySpace.SMEM)

    kernel = functools.partial(_vae_kernel, B, latent)

    out_shape = (
        jax.ShapeDtypeStruct((4,), jnp.float32),        # [loss, rl, kld, rl2]
        jax.ShapeDtypeStruct((B_pad, D), jnp.float32),  # recon_x_2
        jax.ShapeDtypeStruct((B_pad, D), jnp.float32),  # recon_x
    )
    out_specs = (sspec, vspec, vspec)

    scal, rx2, rx = pl.pallas_call(
        kernel,
        out_shape=out_shape,
        in_specs=[vspec] * 11,
        out_specs=out_specs,
        compiler_params=pltpu.CompilerParams(
            vmem_limit_bytes=32 * 1024 * 1024),
    )(x, x2, eps, w1_b, b1, wml_b, bml, w2_b, b2, wout_b, bout)

    loss, recon_loss, kld, recon_loss_2 = scal[0], scal[1], scal[2], scal[3]
    recon_x_2 = rx2[:B].reshape(x_nchw.shape)
    recon_x = rx[:B].reshape(x_nchw.shape)
    return (loss, recon_loss, kld, recon_x_2, recon_x, recon_loss_2)


if __name__ == "__main__":
    B, C, H, W = 2, 4, 16, 16
    D = C * H * W
    HIDDEN, LATENT = 32, 16

    key = jax.random.PRNGKey(0)
    k_x, k_x2, k_eps, k_params = jax.random.split(key, 4)

    x = jax.random.normal(k_x, (B, C, H, W), jnp.float32)
    x2 = jax.random.normal(k_x2, (B, C, H, W), jnp.float32)
    eps = jax.random.normal(k_eps, (B, LATENT), jnp.float32)   # torch.randn_like(std)
    params = make_params(k_params, D, HIDDEN, LATENT)
    prepared = jax.block_until_ready(prepare_params(params))   # once, cached

    outs = vae_forward(x, x2, eps, prepared)
    outs = jax.block_until_ready(outs)

    loss, recon_loss, kld, recon_x_2, recon_x, recon_loss_2 = outs
    assert recon_x.shape == (B, C, H, W)
    assert recon_x_2.shape == (B, C, H, W)
    assert all(jnp.isfinite(v).all() for v in outs)
    print("KERNEL_OK")
</pallas_src>

<mosaic_0001>
module attributes {stable_mosaic.version = 11 : i64} {
  func.func @_vae_kernel(%arg0: memref<16x1024xf32, #tpu.memory_space<vmem>>, %arg1: memref<16x1024xf32, #tpu.memory_space<vmem>>, %arg2: memref<16x16xf32, #tpu.memory_space<vmem>>, %arg3: memref<1024x32xbf16, #tpu.memory_space<vmem>>, %arg4: memref<1x32xf32, #tpu.memory_space<vmem>>, %arg5: memref<32x32xbf16, #tpu.memory_space<vmem>>, %arg6: memref<1x32xf32, #tpu.memory_space<vmem>>, %arg7: memref<16x32xbf16, #tpu.memory_space<vmem>>, %arg8: memref<1x32xf32, #tpu.memory_space<vmem>>, %arg9: memref<32x1024xbf16, #tpu.memory_space<vmem>>, %arg10: memref<1x1024xf32, #tpu.memory_space<vmem>>, %arg11: memref<4xf32, #tpu.memory_space<smem>>, %arg12: memref<16x1024xf32, #tpu.memory_space<vmem>>, %arg13: memref<16x1024xf32, #tpu.memory_space<vmem>>) attributes {dimension_semantics = [], scalar_prefetch = 0 : i64, scratch_operands = 0 : i64, tpu.core_type = #tpu.core_type<tc>} {
    %c0 = arith.constant 0 : index
    %c0_0 = arith.constant 0 : index
    %0 = vector.load %arg0[%c0, %c0_0] : memref<16x1024xf32, #tpu.memory_space<vmem>>, vector<16x1024xf32>
    %c0_1 = arith.constant 0 : index
    %c0_2 = arith.constant 0 : index
    %1 = vector.load %arg1[%c0_1, %c0_2] : memref<16x1024xf32, #tpu.memory_space<vmem>>, vector<16x1024xf32>
    %2 = arith.truncf %0 : vector<16x1024xf32> to vector<16x1024xbf16>
    %c0_3 = arith.constant 0 : index
    %c0_4 = arith.constant 0 : index
    %3 = vector.load %arg3[%c0_3, %c0_4] : memref<1024x32xbf16, #tpu.memory_space<vmem>>, vector<1024x32xbf16>
    %cst = arith.constant dense<0.000000e+00> : vector<16x32xf32>
    %4 = tpu.matmul %2, %3, %cst {dimension_numbers = #tpu.dot_dimension_numbers<[1], [0], [0], [1], [0, 0, 1, 1], [], []>} : vector<16x1024xbf16>, vector<1024x32xbf16>, vector<16x32xf32> -> vector<16x32xf32>
    %c0_5 = arith.constant 0 : index
    %c0_6 = arith.constant 0 : index
    %5 = vector.load %arg4[%c0_5, %c0_6] : memref<1x32xf32, #tpu.memory_space<vmem>>, vector<1x32xf32>
    %6 = vector.broadcast %5 : vector<1x32xf32> to vector<16x32xf32>
    %7 = arith.addf %4, %6 : vector<16x32xf32>
    %cst_7 = arith.constant 0.000000e+00 : f32
    %8 = vector.broadcast %cst_7 : f32 to vector<16x32xf32>
    %9 = arith.maximumf %7, %8 : vector<16x32xf32>
    %10 = arith.truncf %9 : vector<16x32xf32> to vector<16x32xbf16>
    %c0_8 = arith.constant 0 : index
    %c0_9 = arith.constant 0 : index
    %11 = vector.load %arg5[%c0_8, %c0_9] : memref<32x32xbf16, #tpu.memory_space<vmem>>, vector<32x32xbf16>
    %cst_10 = arith.constant dense<0.000000e+00> : vector<16x32xf32>
    %12 = tpu.matmul %10, %11, %cst_10 {dimension_numbers = #tpu.dot_dimension_numbers<[1], [0], [0], [1], [0, 0, 1, 1], [], []>} : vector<16x32xbf16>, vector<32x32xbf16>, vector<16x32xf32> -> vector<16x32xf32>
    %c0_11 = arith.constant 0 : index
    %c0_12 = arith.constant 0 : index
    %13 = vector.load %arg6[%c0_11, %c0_12] : memref<1x32xf32, #tpu.memory_space<vmem>>, vector<1x32xf32>
    %14 = vector.broadcast %13 : vector<1x32xf32> to vector<16x32xf32>
    %15 = arith.addf %12, %14 : vector<16x32xf32>
    %16 = vector.extract_strided_slice %15 {offsets = [0, 0], sizes = [16, 16], strides = [1, 1]} : vector<16x32xf32> to vector<16x16xf32>
    %17 = vector.extract_strided_slice %15 {offsets = [0, 16], sizes = [16, 16], strides = [1, 1]} : vector<16x32xf32> to vector<16x16xf32>
    %cst_13 = arith.constant 5.000000e-01 : f32
    %18 = vector.broadcast %cst_13 : f32 to vector<16x16xf32>
    %19 = arith.mulf %18, %17 : vector<16x16xf32>
    %20 = math.exp %19 : vector<16x16xf32>
    %c0_14 = arith.constant 0 : index
    %c0_15 = arith.constant 0 : index
    %21 = vector.load %arg2[%c0_14, %c0_15] : memref<16x16xf32, #tpu.memory_space<vmem>>, vector<16x16xf32>
    %22 = arith.mulf %21, %20 : vector<16x16xf32>
    %23 = arith.addf %16, %22 : vector<16x16xf32>
    %24 = arith.truncf %23 : vector<16x16xf32> to vector<16x16xbf16>
    %c0_16 = arith.constant 0 : index
    %c0_17 = arith.constant 0 : index
    %25 = vector.load %arg7[%c0_16, %c0_17] : memref<16x32xbf16, #tpu.memory_space<vmem>>, vector<16x32xbf16>
    %cst_18 = arith.constant dense<0.000000e+00> : vector<16x32xf32>
    %26 = tpu.matmul %24, %25, %cst_18 {dimension_numbers = #tpu.dot_dimension_numbers<[1], [0], [0], [1], [0, 0, 1, 1], [], []>} : vector<16x16xbf16>, vector<16x32xbf16>, vector<16x32xf32> -> vector<16x32xf32>
    %c0_19 = arith.constant 0 : index
    %c0_20 = arith.constant 0 : index
    %27 = vector.load %arg8[%c0_19, %c0_20] : memref<1x32xf32, #tpu.memory_space<vmem>>, vector<1x32xf32>
    %28 = vector.broadcast %27 : vector<1x32xf32> to vector<16x32xf32>
    %29 = arith.addf %26, %28 : vector<16x32xf32>
    %cst_21 = arith.constant 0.000000e+00 : f32
    %30 = vector.broadcast %cst_21 : f32 to vector<16x32xf32>
    %31 = arith.maximumf %29, %30 : vector<16x32xf32>
    %32 = arith.truncf %31 : vector<16x32xf32> to vector<16x32xbf16>
    %c0_22 = arith.constant 0 : index
    %c0_23 = arith.constant 0 : index
    %33 = vector.load %arg9[%c0_22, %c0_23] : memref<32x1024xbf16, #tpu.memory_space<vmem>>, vector<32x1024xbf16>
    %cst_24 = arith.constant dense<0.000000e+00> : vector<16x1024xf32>
    %34 = tpu.matmul %32, %33, %cst_24 {dimension_numbers = #tpu.dot_dimension_numbers<[1], [0], [0], [1], [0, 0, 1, 1], [], []>} : vector<16x32xbf16>, vector<32x1024xbf16>, vector<16x1024xf32> -> vector<16x1024xf32>
    %c0_25 = arith.constant 0 : index
    %c0_26 = arith.constant 0 : index
    %35 = vector.load %arg10[%c0_25, %c0_26] : memref<1x1024xf32, #tpu.memory_space<vmem>>, vector<1x1024xf32>
    %36 = vector.broadcast %35 : vector<1x1024xf32> to vector<16x1024xf32>
    %37 = arith.addf %34, %36 : vector<16x1024xf32>
    %c0_27 = arith.constant 0 : index
    %c0_28 = arith.constant 0 : index
    %38 = vector.load %arg13[%c0_27, %c0_28] : memref<16x1024xf32, #tpu.memory_space<vmem>>, vector<16x1024xf32>
    tpu.vector_store %arg13[%c0_27, %c0_28], %37 {strides = array<i32>} : memref<16x1024xf32, #tpu.memory_space<vmem>>, vector<16x1024xf32>,
    %cst_29 = arith.constant 1.000000e-01 : f32
    %39 = vector.broadcast %cst_29 : f32 to vector<16x1024xf32>
    %40 = arith.mulf %39, %37 : vector<16x1024xf32>
    %cst_30 = arith.constant 0.899999976 : f32
    %41 = vector.broadcast %cst_30 : f32 to vector<16x1024xf32>
    %42 = arith.mulf %41, %0 : vector<16x1024xf32>
    %43 = arith.addf %40, %42 : vector<16x1024xf32>
    %c0_31 = arith.constant 0 : index
    %c0_32 = arith.constant 0 : index
    %44 = vector.load %arg12[%c0_31, %c0_32] : memref<16x1024xf32, #tpu.memory_space<vmem>>, vector<16x1024xf32>
    tpu.vector_store %arg12[%c0_31, %c0_32], %43 {strides = array<i32>} : memref<16x1024xf32, #tpu.memory_space<vmem>>, vector<16x1024xf32>,
    %45 = arith.subf %37, %1 : vector<16x1024xf32>
    %46 = arith.mulf %0, %0 : vector<16x1024xf32>
    %47 = arith.mulf %37, %37 : vector<16x1024xf32>
    %48 = arith.mulf %45, %45 : vector<16x1024xf32>
    %49 = tpu.concatenate %46, %47, %48 in 0 : vector<16x1024xf32>, vector<16x1024xf32>, vector<16x1024xf32> -> vector<48x1024xf32>
    %cst_33 = arith.constant dense<0.000000e+00> : vector<48xf32>
    %50 = vector.multi_reduction <add>, %49, %cst_33 [1] : vector<48x1024xf32> to vector<48xf32>
    %51 = vector.shape_cast %50 : vector<48xf32> to vector<48x1xf32>
    %52 = vector.extract_strided_slice %51 {offsets = [0, 0], sizes = [16, 1], strides = [1, 1]} : vector<48x1xf32> to vector<16x1xf32>
    %53 = vector.extract_strided_slice %51 {offsets = [16, 0], sizes = [16, 1], strides = [1, 1]} : vector<48x1xf32> to vector<16x1xf32>
    %54 = vector.extract_strided_slice %51 {offsets = [32, 0], sizes = [16, 1], strides = [1, 1]} : vector<48x1xf32> to vector<16x1xf32>
    %cst_34 = arith.constant 5.000000e-01 : f32
    %55 = vector.broadcast %cst_34 : f32 to vector<16x1xf32>
    %56 = arith.mulf %55, %54 : vector<16x1xf32>
    %cst_35 = arith.constant 1.000000e+00 : f32
    %57 = vector.broadcast %cst_35 : f32 to vector<16x16xf32>
    %58 = arith.addf %57, %17 : vector<16x16xf32>
    %59 = arith.mulf %16, %16 : vector<16x16xf32>
    %60 = arith.subf %58, %59 : vector<16x16xf32>
    %61 = arith.mulf %20, %20 : vector<16x16xf32>
    %62 = arith.subf %60, %61 : vector<16x16xf32>
    %cst_36 = arith.constant dense<0.000000e+00> : vector<16xf32>
    %63 = vector.multi_reduction <add>, %62, %cst_36 [1] : vector<16x16xf32> to vector<16xf32>
    %64 = vector.shape_cast %63 : vector<16xf32> to vector<16x1xf32>
    %cst_37 = arith.constant -5.000000e-01 : f32
    %65 = vector.broadcast %cst_37 : f32 to vector<16x1xf32>
    %66 = arith.mulf %65, %64 : vector<16x1xf32>
    %67 = tpu.iota {dimensions = array<i32: 0>} : vector<16x1xi32>
    %c2_i32 = arith.constant 2 : i32
    %68 = vector.broadcast %c2_i32 : i32 to vector<16x1xi32>
    %69 = arith.cmpi slt, %67, %68 : vector<16x1xi32>
    %70 = arith.extui %69 : vector<16x1xi1> to vector<16x1xi32>
    %71 = arith.sitofp %70 : vector<16x1xi32> to vector<16x1xf32>
    %72 = arith.mulf %56, %71 : vector<16x1xf32>
    %73 = vector.shape_cast %72 : vector<16x1xf32> to vector<1x16x1xf32>
    %cst_38 = arith.constant dense<0.000000e+00> : vector<1xf32>
    %74 = vector.multi_reduction <add>, %73, %cst_38 [1, 2] : vector<1x16x1xf32> to vector<1xf32>
    %75 = vector.shape_cast %74 : vector<1xf32> to vector<1x1x1xf32>
    %76 = vector.extract %75[0, 0, 0] : f32 from vector<1x1x1xf32>
    %cst_39 = arith.constant 5.000000e-01 : f32
    %77 = arith.mulf %76, %cst_39 : f32
    %78 = arith.mulf %66, %71 : vector<16x1xf32>
    %79 = vector.shape_cast %78 : vector<16x1xf32> to vector<1x16x1xf32>
    %cst_40 = arith.constant dense<0.000000e+00> : vector<1xf32>
    %80 = vector.multi_reduction <add>, %79, %cst_40 [1, 2] : vector<1x16x1xf32> to vector<1xf32>
    %81 = vector.shape_cast %80 : vector<1xf32> to vector<1x1x1xf32>
    %82 = vector.extract %81[0, 0, 0] : f32 from vector<1x1x1xf32>
    %cst_41 = arith.constant 5.000000e-01 : f32
    %83 = arith.mulf %82, %cst_41 : f32
    %84 = arith.addf %77, %83 : f32
    %cst_42 = arith.constant dense<0.000000e+00> : vector<16x16xf32>
    %85 = tpu.matmul %0, %37, %cst_42 {dimension_numbers = #tpu.dot_dimension_numbers<[1], [1], [0], [0], [0, 0, 1, 0], [], []>} : vector<16x1024xf32>, vector<16x1024xf32>, vector<16x16xf32> -> vector<16x16xf32>
    %86 = tpu.transpose %53, [1, 0] : vector<16x1xf32> -> vector<1x16xf32>
    %87 = vector.broadcast %52 : vector<16x1xf32> to vector<16x16xf32>
    %88 = vector.broadcast %86 : vector<1x16xf32> to vector<16x16xf32>
    %89 = arith.addf %87, %88 : vector<16x16xf32>
    %cst_43 = arith.constant 2.000000e+00 : f32
    %90 = vector.broadcast %cst_43 : f32 to vector<16x16xf32>
    %91 = arith.mulf %90, %85 : vector<16x16xf32>
    %92 = arith.subf %89, %91 : vector<16x16xf32>
    %cst_44 = arith.constant 0.000000e+00 : f32
    %93 = vector.broadcast %cst_44 : f32 to vector<16x16xf32>
    %94 = arith.subf %93, %92 : vector<16x16xf32>
    %cst_45 = arith.constant 5.000000e-02 : f32
    %95 = vector.broadcast %cst_45 : f32 to vector<16x16xf32>
    %96 = arith.mulf %94, %95 : vector<16x16xf32>
    %97 = tpu.iota {dimensions = array<i32: 1>} : vector<1x16xi32>
    %c2_i32_46 = arith.constant 2 : i32
    %98 = vector.broadcast %c2_i32_46 : i32 to vector<1x16xi32>
    %99 = arith.cmpi slt, %97, %98 : vector<1x16xi32>
    %cst_47 = arith.constant -1.000000e+30 : f32
    %100 = vector.shape_cast %99 : vector<1x16xi1> to vector<1x16xi1>
    %101 = vector.broadcast %100 : vector<1x16xi1> to vector<16x16xi1>
    %102 = vector.broadcast %cst_47 : f32 to vector<16x16xf32>
    %103 = arith.select %101, %96, %102 : vector<16x16xi1>, vector<16x16xf32>
    %cst_48 = arith.constant dense<0xFF800000> : vector<16xf32>
    %104 = vector.multi_reduction <maximumf>, %103, %cst_48 [1] : vector<16x16xf32> to vector<16xf32>
    %105 = vector.shape_cast %104 : vector<16xf32> to vector<16x1xf32>
    %106 = vector.broadcast %105 : vector<16x1xf32> to vector<16x16xf32>
    %107 = arith.subf %103, %106 : vector<16x16xf32>
    %108 = math.exp %107 : vector<16x16xf32>
    %cst_49 = arith.constant dense<0.000000e+00> : vector<16xf32>
    %109 = vector.multi_reduction <add>, %108, %cst_49 [1] : vector<16x16xf32> to vector<16xf32>
    %110 = vector.shape_cast %109 : vector<16xf32> to vector<16x1xf32>
    %111 = math.log %110 : vector<16x1xf32>
    %112 = arith.addf %105, %111 : vector<16x1xf32>
    %113 = arith.mulf %112, %71 : vector<16x1xf32>
    %114 = vector.shape_cast %113 : vector<16x1xf32> to vector<1x16x1xf32>
    %cst_50 = arith.constant dense<0.000000e+00> : vector<1xf32>
    %115 = vector.multi_reduction <add>, %114, %cst_50 [1, 2] : vector<1x16x1xf32> to vector<1xf32>
    %116 = vector.shape_cast %115 : vector<1xf32> to vector<1x1x1xf32>
    %117 = vector.extract %116[0, 0, 0] : f32 from vector<1x1x1xf32>
    %cst_51 = arith.constant 0.000000e+00 : f32
    %118 = arith.subf %cst_51, %117 : f32
    %cst_52 = arith.constant 5.000000e-01 : f32
    %119 = arith.mulf %118, %cst_52 : f32
    %c0_53 = arith.constant 0 : index
    %120 = memref.load %arg11[%c0_53] : memref<4xf32, #tpu.memory_space<smem>>
    memref.store %84, %arg11[%c0_53] : memref<4xf32, #tpu.memory_space<smem>>
    %c1 = arith.constant 1 : index
    %121 = memref.load %arg11[%c1] : memref<4xf32, #tpu.memory_space<smem>>
    memref.store %77, %arg11[%c1] : memref<4xf32, #tpu.memory_space<smem>>
    %c2 = arith.constant 2 : index
    %122 = memref.load %arg11[%c2] : memref<4xf32, #tpu.memory_space<smem>>
    memref.store %83, %arg11[%c2] : memref<4xf32, #tpu.memory_space<smem>>
    %c3 = arith.constant 3 : index
    %123 = memref.load %arg11[%c3] : memref<4xf32, #tpu.memory_space<smem>>
    memref.store %119, %arg11[%c3] : memref<4xf32, #tpu.memory_space<smem>>
    return
  }
}

</mosaic_0001>

<llo_original>
// kernel: tpu_custom_call.1
$region0: #{tpu_custom_call.1}
  #allocation0 [shape = 'u32[]', space=smem, size = 0x4, offset = 0x4, fixed_abs, tag = 'smem constant byte address 0x4 - core index']
  #allocation1 [shape = 'u32[144,128]{1,0:T(1,128)}', space=vmem, size = 0x12000, scoped, tag = 'internal scratch']
  %s0 = inlined_call_operand.vmem [shape: f32[16,1024], index: 0, kind: input, shape index: {}]
  %s1 = inlined_call_operand.vmem [shape: f32[16,1024], index: 1, kind: input, shape index: {}]
  %s2 = inlined_call_operand.vmem [shape: f32[16,16], index: 2, kind: input, shape index: {}]
  %s3 = inlined_call_operand.vmem [shape: bf16[1024,32], index: 3, kind: input, shape index: {}]
  %s4 = inlined_call_operand.vmem [shape: f32[1,32], index: 4, kind: input, shape index: {}]
  %s5 = inlined_call_operand.vmem [shape: bf16[32,32], index: 5, kind: input, shape index: {}]
  %s6 = inlined_call_operand.vmem [shape: f32[1,32], index: 6, kind: input, shape index: {}]
  %s7 = inlined_call_operand.vmem [shape: bf16[16,32], index: 7, kind: input, shape index: {}]
  %s8 = inlined_call_operand.vmem [shape: f32[1,32], index: 8, kind: input, shape index: {}]
  %s9 = inlined_call_operand.vmem [shape: bf16[32,1024], index: 9, kind: input, shape index: {}]
  %s10 = inlined_call_operand.vmem [shape: f32[1,1024], index: 10, kind: input, shape index: {}]
  %s11 = inlined_call_operand.hbm [shape: f32[4], index: 11, kind: output, shape index: {0}]
  %s12 = inlined_call_operand.hbm [shape: f32[16,1024], index: 12, kind: output, shape index: {1}]
  %s13 = inlined_call_operand.hbm [shape: f32[16,1024], index: 13, kind: output, shape index: {2}]
  %14 = xla_tuple %s11, %s12, %s13
  %s15 = sld [smem:[#allocation0]]
  $region70: #{tpu_custom_call.1} parent=0
    _
  %s17 = ssub.s32 1, %s15
  %s18 = scalar_select 0, %s17, %s15
  $region1: #{tpu_custom_call.1} parent=0
    #allocation2 [shape = 'u8[512]{0}', space=smem, size = 0x200, scoped, tag = 'output window, operand 0, single buffered']
    #allocation3 [shape = 's32[1]{0}', space=sflag, size = 0x4, scoped, tag = 'scoped memory for tpu_custom_call.1']
    #allocation4 [shape = 's32[1]{0}', space=sflag, size = 0x4, scoped, tag = 'scoped memory for tpu_custom_call.1']
    #allocation5 [shape = 'u8[65536]{0}', space=vmem, size = 0x10000, scoped, tag = 'output window, operand 1, single buffered']
    #allocation6 [shape = 'u8[65536]{0}', space=vmem, size = 0x10000, scoped, tag = 'output window, operand 2, single buffered']
    #allocation7 [shape = 's32[1]{0}', space=sflag, size = 0x4, scoped, tag = 'scoped memory for tpu_custom_call.1']
    %19 = vsyncpa [#allocation4], 0
    %20 = vsyncpa [#allocation3], 0
    %21 = vsyncpa [#allocation7], 0
    // Predicated region
    $region2: #{tpu_custom_call.1} parent=1 // pred_check
      _
    $region3: #{tpu_custom_call.1} parent=1 // pred_check_branch
      %23 = sbr.rel (0) target = $region5
    $region4: #{tpu_custom_call.1} parent=1 // pred_region
      _
    $region5: #{tpu_custom_call.1} parent=1 // pred_fallthru
      _
    // Predicated region
    $region6: #{tpu_custom_call.1} parent=1 // pred_check
      _
    $region7: #{tpu_custom_call.1} parent=1 // pred_check_branch
      %25 = sbr.rel (0) target = $region9
    $region8: #{tpu_custom_call.1} parent=1 // pred_region
      _
    $region9: #{tpu_custom_call.1} parent=1 // pred_fallthru
      _
    // Predicated region
    $region10: #{tpu_custom_call.1} parent=1 // pred_check
      _
    $region11: #{tpu_custom_call.1} parent=1 // pred_check_branch
      %27 = sbr.rel (0) target = $region13
    $region12: #{tpu_custom_call.1} parent=1 // pred_region
      _
    $region13: #{tpu_custom_call.1} parent=1 // pred_fallthru
      _
    // Predicated region
    $region14: #{tpu_custom_call.1} parent=1 // pred_check
      _
    $region15: #{tpu_custom_call.1} parent=1 // pred_check_branch
      %29 = sbr.rel (0) target = $region17
    $region16: #{tpu_custom_call.1} parent=1 // pred_region
      _
    $region17: #{tpu_custom_call.1} parent=1 // pred_fallthru
      _
    // Predicated region
    $region18: #{tpu_custom_call.1} parent=1 // pred_check
      _
    $region19: #{tpu_custom_call.1} parent=1 // pred_check_branch
      %31 = sbr.rel (0) target = $region21
    $region20: #{tpu_custom_call.1} parent=1 // pred_region
      _
    $region21: #{tpu_custom_call.1} parent=1 // pred_fallthru
      _
    // Predicated region
    $region22: #{tpu_custom_call.1} parent=1 // pred_check
      _
    $region23: #{tpu_custom_call.1} parent=1 // pred_check_branch
      %33 = sbr.rel (0) target = $region25
    $region24: #{tpu_custom_call.1} parent=1 // pred_region
      _
    $region25: #{tpu_custom_call.1} parent=1 // pred_fallthru
      _
    // Predicated region
    $region26: #{tpu_custom_call.1} parent=1 // pred_check
      _
    $region27: #{tpu_custom_call.1} parent=1 // pred_check_branch
      %35 = sbr.rel (0) target = $region29
    $region28: #{tpu_custom_call.1} parent=1 // pred_region
      _
    $region29: #{tpu_custom_call.1} parent=1 // pred_fallthru
      _
    // Predicated region
    $region30: #{tpu_custom_call.1} parent=1 // pred_check
      _
    $region31: #{tpu_custom_call.1} parent=1 // pred_check_branch
      %37 = sbr.rel (0) target = $region33
    $region32: #{tpu_custom_call.1} parent=1 // pred_region
      _
    $region33: #{tpu_custom_call.1} parent=1 // pred_fallthru
      _
    // Predicated region
    $region34: #{tpu_custom_call.1} parent=1 // pred_check
      _
    $region35: #{tpu_custom_call.1} parent=1 // pred_check_branch
      %39 = sbr.rel (0) target = $region37
    $region36: #{tpu_custom_call.1} parent=1 // pred_region
      _
    $region37: #{tpu_custom_call.1} parent=1 // pred_fallthru
      _
    // Predicated region
    $region38: #{tpu_custom_call.1} parent=1 // pred_check
      _
    $region39: #{tpu_custom_call.1} parent=1 // pred_check_branch
      %41 = sbr.rel (0) target = $region41
    $region40: #{tpu_custom_call.1} parent=1 // pred_region
      _
    $region41: #{tpu_custom_call.1} parent=1 // pred_fallthru
      _
    // Predicated region
    $region42: #{tpu_custom_call.1} parent=1 // pred_check
      _
    $region43: #{tpu_custom_call.1} parent=1 // pred_check_branch
      %43 = sbr.rel (0) target = $region45
    $region44: #{tpu_custom_call.1} parent=1 // pred_region
      _
    $region45: #{tpu_custom_call.1} parent=1 // pred_fallthru
      _
    %v45 = vld [vmem:[%s0] sm:$0xff]
    %v46 = vld [vmem:[%s0 + $0x8] sm:$0xff]
    %v47 = vld [vmem:[%s0 + $0x10] sm:$0xff]
    %v48 = vld [vmem:[%s0 + $0x18] sm:$0xff]
    %v49 = vld [vmem:[%s0 + $0x20] sm:$0xff]
    %v50 = vld [vmem:[%s0 + $0x28] sm:$0xff]
    %v51 = vld [vmem:[%s0 + $0x30] sm:$0xff]
    %v52 = vld [vmem:[%s0 + $0x38] sm:$0xff]
    %v53 = vld [vmem:[%s0 + $0x40] sm:$0xff]
    %v54 = vld [vmem:[%s0 + $0x48] sm:$0xff]
    %v55 = vld [vmem:[%s0 + $0x50] sm:$0xff]
    %v56 = vld [vmem:[%s0 + $0x58] sm:$0xff]
    %v57 = vld [vmem:[%s0 + $0x60] sm:$0xff]
    %v58 = vld [vmem:[%s0 + $0x68] sm:$0xff]
    %v59 = vld [vmem:[%s0 + $0x70] sm:$0xff]
    %v60 = vld [vmem:[%s0 + $0x78] sm:$0xff]
    %v61 = vld [vmem:[%s1] sm:$0xff]
    %v62 = vld [vmem:[%s1 + $0x8] sm:$0xff]
    %v63 = vld [vmem:[%s1 + $0x10] sm:$0xff]
    %v64 = vld [vmem:[%s1 + $0x18] sm:$0xff]
    %v65 = vld [vmem:[%s1 + $0x20] sm:$0xff]
    %v66 = vld [vmem:[%s1 + $0x28] sm:$0xff]
    %v67 = vld [vmem:[%s1 + $0x30] sm:$0xff]
    %v68 = vld [vmem:[%s1 + $0x38] sm:$0xff]
    %v69 = vld [vmem:[%s1 + $0x40] sm:$0xff]
    %v70 = vld [vmem:[%s1 + $0x48] sm:$0xff]
    %v71 = vld [vmem:[%s1 + $0x50] sm:$0xff]
    %v72 = vld [vmem:[%s1 + $0x58] sm:$0xff]
    %v73 = vld [vmem:[%s1 + $0x60] sm:$0xff]
    %v74 = vld [vmem:[%s1 + $0x68] sm:$0xff]
    %v75 = vld [vmem:[%s1 + $0x70] sm:$0xff]
    %v76 = vld [vmem:[%s1 + $0x78] sm:$0xff]
    %v77 = vpack.c.bf16 %v53, %v45
    %v78 = vpack.c.bf16 %v54, %v46
    %v79 = vpack.c.bf16 %v55, %v47
    %v80 = vpack.c.bf16 %v56, %v48
    %v81 = vpack.c.bf16 %v57, %v49
    %v82 = vpack.c.bf16 %v58, %v50
    %v83 = vpack.c.bf16 %v59, %v51
    %v84 = vpack.c.bf16 %v60, %v52
    %v85 = vld [vmem:[%s3] sm:$0xf]
    %v86 = vld [vmem:[%s3 + $0x4] sm:$0xf]
    %v87 = vld [vmem:[%s3 + $0x8] sm:$0xf]
    %v88 = vld [vmem:[%s3 + $0xc] sm:$0xf]
    %v89 = vld [vmem:[%s3 + $0x10] sm:$0xf]
    %v90 = vld [vmem:[%s3 + $0x14] sm:$0xf]
    %v91 = vld [vmem:[%s3 + $0x18] sm:$0xf]
    %v92 = vld [vmem:[%s3 + $0x1c] sm:$0xf]
    %v93 = vld [vmem:[%s3 + $0x20] sm:$0xf]
    %v94 = vld [vmem:[%s3 + $0x24] sm:$0xf]
    %v95 = vld [vmem:[%s3 + $0x28] sm:$0xf]
    %v96 = vld [vmem:[%s3 + $0x2c] sm:$0xf]
    %v97 = vld [vmem:[%s3 + $0x30] sm:$0xf]
    %v98 = vld [vmem:[%s3 + $0x34] sm:$0xf]
    %v99 = vld [vmem:[%s3 + $0x38] sm:$0xf]
    %v100 = vld [vmem:[%s3 + $0x3c] sm:$0xf]
    %v101 = vld [vmem:[%s3 + $0x40] sm:$0xf]
    %v102 = vld [vmem:[%s3 + $0x44] sm:$0xf]
    %v103 = vld [vmem:[%s3 + $0x48] sm:$0xf]
    %v104 = vld [vmem:[%s3 + $0x4c] sm:$0xf]
    %v105 = vld [vmem:[%s3 + $0x50] sm:$0xf]
    %v106 = vld [vmem:[%s3 + $0x54] sm:$0xf]
    %v107 = vld [vmem:[%s3 + $0x58] sm:$0xf]
    %v108 = vld [vmem:[%s3 + $0x5c] sm:$0xf]
    %v109 = vld [vmem:[%s3 + $0x60] sm:$0xf]
    %v110 = vld [vmem:[%s3 + $0x64] sm:$0xf]
    %v111 = vld [vmem:[%s3 + $0x68] sm:$0xf]
    %v112 = vld [vmem:[%s3 + $0x6c] sm:$0xf]
    %v113 = vld [vmem:[%s3 + $0x70] sm:$0xf]
    %v114 = vld [vmem:[%s3 + $0x74] sm:$0xf]
    %v115 = vld [vmem:[%s3 + $0x78] sm:$0xf]
    %v116 = vld [vmem:[%s3 + $0x7c] sm:$0xf]
    %v117 = vld [vmem:[%s3 + $0x80] sm:$0xf]
    %v118 = vld [vmem:[%s3 + $0x84] sm:$0xf]
    %v119 = vld [vmem:[%s3 + $0x88] sm:$0xf]
    %v120 = vld [vmem:[%s3 + $0x8c] sm:$0xf]
    %v121 = vld [vmem:[%s3 + $0x90] sm:$0xf]
    %v122 = vld [vmem:[%s3 + $0x94] sm:$0xf]
    %v123 = vld [vmem:[%s3 + $0x98] sm:$0xf]
    %v124 = vld [vmem:[%s3 + $0x9c] sm:$0xf]
    %v125 = vld [vmem:[%s3 + $0xa0] sm:$0xf]
    %v126 = vld [vmem:[%s3 + $0xa4] sm:$0xf]
    %v127 = vld [vmem:[%s3 + $0xa8] sm:$0xf]
    %v128 = vld [vmem:[%s3 + $0xac] sm:$0xf]
    %v129 = vld [vmem:[%s3 + $0xb0] sm:$0xf]
    %v130 = vld [vmem:[%s3 + $0xb4] sm:$0xf]
    %v131 = vld [vmem:[%s3 + $0xb8] sm:$0xf]
    %v132 = vld [vmem:[%s3 + $0xbc] sm:$0xf]
    %v133 = vld [vmem:[%s3 + $0xc0] sm:$0xf]
    %v134 = vld [vmem:[%s3 + $0xc4] sm:$0xf]
    %v135 = vld [vmem:[%s3 + $0xc8] sm:$0xf]
    %v136 = vld [vmem:[%s3 + $0xcc] sm:$0xf]
    %v137 = vld [vmem:[%s3 + $0xd0] sm:$0xf]
    %v138 = vld [vmem:[%s3 + $0xd4] sm:$0xf]
    %v139 = vld [vmem:[%s3 + $0xd8] sm:$0xf]
    %v140 = vld [vmem:[%s3 + $0xdc] sm:$0xf]
    %v141 = vld [vmem:[%s3 + $0xe0] sm:$0xf]
    %v142 = vld [vmem:[%s3 + $0xe4] sm:$0xf]
    %v143 = vld [vmem:[%s3 + $0xe8] sm:$0xf]
    %v144 = vld [vmem:[%s3 + $0xec] sm:$0xf]
    %v145 = vld [vmem:[%s3 + $0xf0] sm:$0xf]
    %v146 = vld [vmem:[%s3 + $0xf4] sm:$0xf]
    %v147 = vld [vmem:[%s3 + $0xf8] sm:$0xf]
    %v148 = vld [vmem:[%s3 + $0xfc] sm:$0xf]
    %v149 = vld [vmem:[%s3 + $0x100] sm:$0xf]
    %v150 = vld [vmem:[%s3 + $0x104] sm:$0xf]
    %v151 = vld [vmem:[%s3 + $0x108] sm:$0xf]
    %v152 = vld [vmem:[%s3 + $0x10c] sm:$0xf]
    %v153 = vld [vmem:[%s3 + $0x110] sm:$0xf]
    %v154 = vld [vmem:[%s3 + $0x114] sm:$0xf]
    %v155 = vld [vmem:[%s3 + $0x118] sm:$0xf]
    %v156 = vld [vmem:[%s3 + $0x11c] sm:$0xf]
    %v157 = vld [vmem:[%s3 + $0x120] sm:$0xf]
    %v158 = vld [vmem:[%s3 + $0x124] sm:$0xf]
    %v159 = vld [vmem:[%s3 + $0x128] sm:$0xf]
    %v160 = vld [vmem:[%s3 + $0x12c] sm:$0xf]
    %v161 = vld [vmem:[%s3 + $0x130] sm:$0xf]
    %v162 = vld [vmem:[%s3 + $0x134] sm:$0xf]
    %v163 = vld [vmem:[%s3 + $0x138] sm:$0xf]
    %v164 = vld [vmem:[%s3 + $0x13c] sm:$0xf]
    %v165 = vld [vmem:[%s3 + $0x140] sm:$0xf]
    %v166 = vld [vmem:[%s3 + $0x144] sm:$0xf]
    %v167 = vld [vmem:[%s3 + $0x148] sm:$0xf]
    %v168 = vld [vmem:[%s3 + $0x14c] sm:$0xf]
    %v169 = vld [vmem:[%s3 + $0x150] sm:$0xf]
    %v170 = vld [vmem:[%s3 + $0x154] sm:$0xf]
    %v171 = vld [vmem:[%s3 + $0x158] sm:$0xf]
    %v172 = vld [vmem:[%s3 + $0x15c] sm:$0xf]
    %v173 = vld [vmem:[%s3 + $0x160] sm:$0xf]
    %v174 = vld [vmem:[%s3 + $0x164] sm:$0xf]
    %v175 = vld [vmem:[%s3 + $0x168] sm:$0xf]
    %v176 = vld [vmem:[%s3 + $0x16c] sm:$0xf]
    %v177 = vld [vmem:[%s3 + $0x170] sm:$0xf]
    %v178 = vld [vmem:[%s3 + $0x174] sm:$0xf]
    %v179 = vld [vmem:[%s3 + $0x178] sm:$0xf]
    %v180 = vld [vmem:[%s3 + $0x17c] sm:$0xf]
    %v181 = vld [vmem:[%s3 + $0x180] sm:$0xf]
    %v182 = vld [vmem:[%s3 + $0x184] sm:$0xf]
    %v183 = vld [vmem:[%s3 + $0x188] sm:$0xf]
    %v184 = vld [vmem:[%s3 + $0x18c] sm:$0xf]
    %v185 = vld [vmem:[%s3 + $0x190] sm:$0xf]
    %v186 = vld [vmem:[%s3 + $0x194] sm:$0xf]
    %v187 = vld [vmem:[%s3 + $0x198] sm:$0xf]
    %v188 = vld [vmem:[%s3 + $0x19c] sm:$0xf]
    %v189 = vld [vmem:[%s3 + $0x1a0] sm:$0xf]
    %v190 = vld [vmem:[%s3 + $0x1a4] sm:$0xf]
    %v191 = vld [vmem:[%s3 + $0x1a8] sm:$0xf]
    %v192 = vld [vmem:[%s3 + $0x1ac] sm:$0xf]
    %v193 = vld [vmem:[%s3 + $0x1b0] sm:$0xf]
    %v194 = vld [vmem:[%s3 + $0x1b4] sm:$0xf]
    %v195 = vld [vmem:[%s3 + $0x1b8] sm:$0xf]
    %v196 = vld [vmem:[%s3 + $0x1bc] sm:$0xf]
    %v197 = vld [vmem:[%s3 + $0x1c0] sm:$0xf]
    %v198 = vld [vmem:[%s3 + $0x1c4] sm:$0xf]
    %v199 = vld [vmem:[%s3 + $0x1c8] sm:$0xf]
    %v200 = vld [vmem:[%s3 + $0x1cc] sm:$0xf]
    %v201 = vld [vmem:[%s3 + $0x1d0] sm:$0xf]
    %v202 = vld [vmem:[%s3 + $0x1d4] sm:$0xf]
    %v203 = vld [vmem:[%s3 + $0x1d8] sm:$0xf]
    %v204 = vld [vmem:[%s3 + $0x1dc] sm:$0xf]
    %v205 = vld [vmem:[%s3 + $0x1e0] sm:$0xf]
    %v206 = vld [vmem:[%s3 + $0x1e4] sm:$0xf]
    %v207 = vld [vmem:[%s3 + $0x1e8] sm:$0xf]
    %v208 = vld [vmem:[%s3 + $0x1ec] sm:$0xf]
    %v209 = vld [vmem:[%s3 + $0x1f0] sm:$0xf]
    %v210 = vld [vmem:[%s3 + $0x1f4] sm:$0xf]
    %v211 = vld [vmem:[%s3 + $0x1f8] sm:$0xf]
    %v212 = vld [vmem:[%s3 + $0x1fc] sm:$0xf]
    %v213 = vld [vmem:[%s4] sm:$0x1]
    %v215 = vlaneseq
    %v216 = vshrl.u32 %v215, 7
    %v217 = vsub.s32 0, %v216
    %v218 = vrot.slane %v213, %v217
    %v348 = vunpack.c.l.b16 %v85
    %v349 = vunpack.c.l.b16 %v86
    %v350 = vunpack.c.l.b16 %v87
    %v351 = vunpack.c.l.b16 %v88
    %v352 = vunpack.c.l.b16 %v89
    %v353 = vunpack.c.l.b16 %v90
    %v354 = vunpack.c.l.b16 %v91
    %v355 = vunpack.c.l.b16 %v92
    %v356 = vunpack.c.l.b16 %v93
    %v357 = vunpack.c.l.b16 %v94
    %v358 = vunpack.c.l.b16 %v95
    %v359 = vunpack.c.l.b16 %v96
    %v360 = vunpack.c.l.b16 %v97
    %v361 = vunpack.c.l.b16 %v98
    %v362 = vunpack.c.l.b16 %v99
    %v363 = vunpack.c.l.b16 %v100
    %v364 = vunpack.c.l.b16 %v101
    %v365 = vunpack.c.l.b16 %v102
    %v366 = vunpack.c.l.b16 %v103
    %v367 = vunpack.c.l.b16 %v104
    %v368 = vunpack.c.l.b16 %v105
    %v369 = vunpack.c.l.b16 %v106
    %v370 = vunpack.c.l.b16 %v107
    %v371 = vunpack.c.l.b16 %v108
    %v372 = vunpack.c.l.b16 %v109
    %v373 = vunpack.c.l.b16 %v110
    %v374 = vunpack.c.l.b16 %v111
    %v375 = vunpack.c.l.b16 %v112
    %v376 = vunpack.c.l.b16 %v113
    %v377 = vunpack.c.l.b16 %v114
    %v378 = vunpack.c.l.b16 %v115
    %v379 = vunpack.c.l.b16 %v116
    %v380 = vunpack.c.l.b16 %v117
    %v381 = vunpack.c.l.b16 %v118
    %v382 = vunpack.c.l.b16 %v119
    %v383 = vunpack.c.l.b16 %v120
    %v384 = vunpack.c.l.b16 %v121
    %v385 = vunpack.c.l.b16 %v122
    %v386 = vunpack.c.l.b16 %v123
    %v387 = vunpack.c.l.b16 %v124
    %v388 = vunpack.c.l.b16 %v125
    %v389 = vunpack.c.l.b16 %v126
    %v390 = vunpack.c.l.b16 %v127
    %v391 = vunpack.c.l.b16 %v128
    %v392 = vunpack.c.l.b16 %v129
    %v393 = vunpack.c.l.b16 %v130
    %v394 = vunpack.c.l.b16 %v131
    %v395 = vunpack.c.l.b16 %v132
    %v396 = vunpack.c.l.b16 %v133
    %v397 = vunpack.c.l.b16 %v134
    %v398 = vunpack.c.l.b16 %v135
    %v399 = vunpack.c.l.b16 %v136
    %v400 = vunpack.c.l.b16 %v137
    %v401 = vunpack.c.l.b16 %v138
    %v402 = vunpack.c.l.b16 %v139
    %v403 = vunpack.c.l.b16 %v140
    %v404 = vunpack.c.l.b16 %v141
    %v405 = vunpack.c.l.b16 %v142
    %v406 = vunpack.c.l.b16 %v143
    %v407 = vunpack.c.l.b16 %v144
    %v408 = vunpack.c.l.b16 %v145
    %v409 = vunpack.c.l.b16 %v146
    %v410 = vunpack.c.l.b16 %v147
    %v411 = vunpack.c.l.b16 %v148
    %v412 = vunpack.c.l.b16 %v149
    %v413 = vunpack.c.l.b16 %v150
    %v414 = vunpack.c.l.b16 %v151
    %v415 = vunpack.c.l.b16 %v152
    %v416 = vunpack.c.l.b16 %v153
    %v417 = vunpack.c.l.b16 %v154
    %v418 = vunpack.c.l.b16 %v155
    %v419 = vunpack.c.l.b16 %v156
    %v420 = vunpack.c.l.b16 %v157
    %v421 = vunpack.c.l.b16 %v158
    %v422 = vunpack.c.l.b16 %v159
    %v423 = vunpack.c.l.b16 %v160
    %v424 = vunpack.c.l.b16 %v161
    %v425 = vunpack.c.l.b16 %v162
    %v426 = vunpack.c.l.b16 %v163
    %v427 = vunpack.c.l.b16 %v164
    %v428 = vunpack.c.l.b16 %v165
    %v429 = vunpack.c.l.b16 %v166
    %v430 = vunpack.c.l.b16 %v167
    %v431 = vunpack.c.l.b16 %v168
    %v432 = vunpack.c.l.b16 %v169
    %v433 = vunpack.c.l.b16 %v170
    %v434 = vunpack.c.l.b16 %v171
    %v435 = vunpack.c.l.b16 %v172
    %v436 = vunpack.c.l.b16 %v173
    %v437 = vunpack.c.l.b16 %v174
    %v438 = vunpack.c.l.b16 %v175
    %v439 = vunpack.c.l.b16 %v176
    %v440 = vunpack.c.l.b16 %v177
    %v441 = vunpack.c.l.b16 %v178
    %v442 = vunpack.c.l.b16 %v179
    %v443 = vunpack.c.l.b16 %v180
    %v444 = vunpack.c.l.b16 %v181
    %v445 = vunpack.c.l.b16 %v182
    %v446 = vunpack.c.l.b16 %v183
    %v447 = vunpack.c.l.b16 %v184
    %v448 = vunpack.c.l.b16 %v185
    %v449 = vunpack.c.l.b16 %v186
    %v450 = vunpack.c.l.b16 %v187
    %v451 = vunpack.c.l.b16 %v188
    %v452 = vunpack.c.l.b16 %v189
    %v453 = vunpack.c.l.b16 %v190
    %v454 = vunpack.c.l.b16 %v191
    %v455 = vunpack.c.l.b16 %v192
    %v456 = vunpack.c.l.b16 %v193
    %v457 = vunpack.c.l.b16 %v194
    %v458 = vunpack.c.l.b16 %v195
    %v459 = vunpack.c.l.b16 %v196
    %v460 = vunpack.c.l.b16 %v197
    %v461 = vunpack.c.l.b16 %v198
    %v462 = vunpack.c.l.b16 %v199
    %v463 = vunpack.c.l.b16 %v200
    %v464 = vunpack.c.l.b16 %v201
    %v465 = vunpack.c.l.b16 %v202
    %v466 = vunpack.c.l.b16 %v203
    %v467 = vunpack.c.l.b16 %v204
    %v468 = vunpack.c.l.b16 %v205
    %v469 = vunpack.c.l.b16 %v206
    %v470 = vunpack.c.l.b16 %v207
    %v471 = vunpack.c.l.b16 %v208
    %v472 = vunpack.c.l.b16 %v209
    %v473 = vunpack.c.l.b16 %v210
    %v474 = vunpack.c.l.b16 %v211
    %v475 = vunpack.c.l.b16 %v212
    %v476 = vpack.c.b16 %v349, %v348
    %v477 = vpack.c.b16 %v351, %v350
    %v478 = vpack.c.b16 %v353, %v352
    %v479 = vpack.c.b16 %v355, %v354
    %v480 = vpack.c.b16 %v357, %v356
    %v481 = vpack.c.b16 %v359, %v358
    %v482 = vpack.c.b16 %v361, %v360
    %v483 = vpack.c.b16 %v363, %v362
    %v484 = vpack.c.b16 %v365, %v364
    %v485 = vpack.c.b16 %v367, %v366
    %v486 = vpack.c.b16 %v369, %v368
    %v487 = vpack.c.b16 %v371, %v370
    %v488 = vpack.c.b16 %v373, %v372
    %v489 = vpack.c.b16 %v375, %v374
    %v490 = vpack.c.b16 %v377, %v376
    %v491 = vpack.c.b16 %v379, %v378
    %v492 = vpack.c.b16 %v381, %v380
    %v493 = vpack.c.b16 %v383, %v382
    %v494 = vpack.c.b16 %v385, %v384
    %v495 = vpack.c.b16 %v387, %v386
    %v496 = vpack.c.b16 %v389, %v388
    %v497 = vpack.c.b16 %v391, %v390
    %v498 = vpack.c.b16 %v393, %v392
    %v499 = vpack.c.b16 %v395, %v394
    %v500 = vpack.c.b16 %v397, %v396
    %v501 = vpack.c.b16 %v399, %v398
    %v502 = vpack.c.b16 %v401, %v400
    %v503 = vpack.c.b16 %v403, %v402
    %v504 = vpack.c.b16 %v405, %v404
    %v505 = vpack.c.b16 %v407, %v406
    %v506 = vpack.c.b16 %v409, %v408
    %v507 = vpack.c.b16 %v411, %v410
    %v508 = vpack.c.b16 %v413, %v412
    %v509 = vpack.c.b16 %v415, %v414
    %v510 = vpack.c.b16 %v417, %v416
    %v511 = vpack.c.b16 %v419, %v418
    %v512 = vpack.c.b16 %v421, %v420
    %v513 = vpack.c.b16 %v423, %v422
    %v514 = vpack.c.b16 %v425, %v424
    %v515 = vpack.c.b16 %v427, %v426
    %v516 = vpack.c.b16 %v429, %v428
    %v517 = vpack.c.b16 %v431, %v430
    %v518 = vpack.c.b16 %v433, %v432
    %v519 = vpack.c.b16 %v435, %v434
    %v520 = vpack.c.b16 %v437, %v436
    %v521 = vpack.c.b16 %v439, %v438
    %v522 = vpack.c.b16 %v441, %v440
    %v523 = vpack.c.b16 %v443, %v442
    %v524 = vpack.c.b16 %v445, %v444
    %v525 = vpack.c.b16 %v447, %v446
    %v526 = vpack.c.b16 %v449, %v448
    %v527 = vpack.c.b16 %v451, %v450
    %v528 = vpack.c.b16 %v453, %v452
    %v529 = vpack.c.b16 %v455, %v454
    %v530 = vpack.c.b16 %v457, %v456
    %v531 = vpack.c.b16 %v459, %v458
    %v532 = vpack.c.b16 %v461, %v460
    %v533 = vpack.c.b16 %v463, %v462
    %v534 = vpack.c.b16 %v465, %v464
    %v535 = vpack.c.b16 %v467, %v466
    %v536 = vpack.c.b16 %v469, %v468
    %v537 = vpack.c.b16 %v471, %v470
    %v538 = vpack.c.b16 %v473, %v472
    %v539 = vpack.c.b16 %v475, %v474
    %604 = vmatprep.subr.bf16.mxu0 0
    %605 = vmatpush1.bf16.msra.mxu0 %v476
    %606 = vmatprep.subr.bf16.mxu0 0
    %607 = vmatpush1.bf16.msra.mxu0 %v477
    %608 = vmatprep.subr.bf16.mxu0 0
    %609 = vmatpush1.bf16.msra.mxu0 %v478
    %610 = vmatprep.subr.bf16.mxu0 0
    %611 = vmatpush1.bf16.msra.mxu0 %v479
    %612 = vmatprep.subr.bf16.mxu0 0
    %613 = vmatpush1.bf16.msra.mxu0 %v480
    %614 = vmatprep.subr.bf16.mxu0 0
    %615 = vmatpush1.bf16.msra.mxu0 %v481
    %616 = vmatprep.subr.bf16.mxu0 0
    %617 = vmatpush1.bf16.msra.mxu0 %v482
    %618 = vmatprep.subr.bf16.mxu0 0
    %619 = vmatpush1.bf16.msra.mxu0 %v483
    %620 = vmatprep.subr.bf16.mxu0 0
    %621 = vmatpush1.bf16.msra.mxu0 %v484
    %622 = vmatprep.subr.bf16.mxu0 0
    %623 = vmatpush1.bf16.msra.mxu0 %v485
    %624 = vmatprep.subr.bf16.mxu0 0
    %625 = vmatpush1.bf16.msra.mxu0 %v486
    %626 = vmatprep.subr.bf16.mxu0 0
    %627 = vmatpush1.bf16.msra.mxu0 %v487
    %628 = vmatprep.subr.bf16.mxu0 0
    %629 = vmatpush1.bf16.msra.mxu0 %v488
    %630 = vmatprep.subr.bf16.mxu0 0
    %631 = vmatpush1.bf16.msra.mxu0 %v489
    %632 = vmatprep.subr.bf16.mxu0 0
    %633 = vmatpush1.bf16.msra.mxu0 %v490
    %634 = vmatprep.subr.bf16.mxu0 0
    %635 = vmatpush1.bf16.msra.mxu0 %v491
    %636 = vmatprep.mubr.bf16.mxu0 %v78
    %637 = vmatmul.mubr.bf16.gmra.mrb[0].mxu0 %v77
    %v638 = vpop.f32.mrb[0].mxu0
    %v639 = vadd.f32 %v218, %v638
    %v640 = vpop.f32.mrb[0].mxu0
    %v641 = vpop.f32.mrb[0].mxu0
    %v642 = vadd.f32 %v218, %v641
    %v643 = vpop.f32.mrb[0].mxu0
    %644 = vdwg.mxu0
    %645 = vmatprep.subr.bf16.mxu0 0
    %646 = vmatpush1.bf16.msra.mxu0 %v492
    %647 = vmatprep.subr.bf16.mxu0 0
    %648 = vmatpush1.bf16.msra.mxu0 %v493
    %649 = vmatprep.subr.bf16.mxu0 0
    %650 = vmatpush1.bf16.msra.mxu0 %v494
    %651 = vmatprep.subr.bf16.mxu0 0
    %652 = vmatpush1.bf16.msra.mxu0 %v495
    %653 = vmatprep.subr.bf16.mxu0 0
    %654 = vmatpush1.bf16.msra.mxu0 %v496
    %655 = vmatprep.subr.bf16.mxu0 0
    %656 = vmatpush1.bf16.msra.mxu0 %v497
    %657 = vmatprep.subr.bf16.mxu0 0
    %658 = vmatpush1.bf16.msra.mxu0 %v498
    %659 = vmatprep.subr.bf16.mxu0 0
    %660 = vmatpush1.bf16.msra.mxu0 %v499
    %661 = vmatprep.subr.bf16.mxu0 0
    %662 = vmatpush1.bf16.msra.mxu0 %v500
    %663 = vmatprep.subr.bf16.mxu0 0
    %664 = vmatpush1.bf16.msra.mxu0 %v501
    %665 = vmatprep.subr.bf16.mxu0 0
    %666 = vmatpush1.bf16.msra.mxu0 %v502
    %667 = vmatprep.subr.bf16.mxu0 0
    %668 = vmatpush1.bf16.msra.mxu0 %v503
    %669 = vmatprep.subr.bf16.mxu0 0
    %670 = vmatpush1.bf16.msra.mxu0 %v504
    %671 = vmatprep.subr.bf16.mxu0 0
    %672 = vmatpush1.bf16.msra.mxu0 %v505
    %673 = vmatprep.subr.bf16.mxu0 0
    %674 = vmatpush1.bf16.msra.mxu0 %v506
    %675 = vmatprep.subr.bf16.mxu0 0
    %676 = vmatpush1.bf16.msra.mxu0 %v507
    %677 = vmatprep.mubr.bf16.mxu0 %v80
    %678 = vmatmul.mubr.bf16.gmra.mrb[0].mxu0 %v79
    %v679 = vpop.f32.mrb[0].mxu0
    %v680 = vadd.f32 %v639, %v679
    %v681 = vpop.f32.mrb[0].mxu0
    %v682 = vpop.f32.mrb[0].mxu0
    %v683 = vadd.f32 %v642, %v682
    %v684 = vpop.f32.mrb[0].mxu0
    %685 = vdwg.mxu0
    %686 = vmatprep.subr.bf16.mxu0 0
    %687 = vmatpush1.bf16.msra.mxu0 %v508
    %688 = vmatprep.subr.bf16.mxu0 0
    %689 = vmatpush1.bf16.msra.mxu0 %v509
    %690 = vmatprep.subr.bf16.mxu0 0
    %691 = vmatpush1.bf16.msra.mxu0 %v510
    %692 = vmatprep.subr.bf16.mxu0 0
    %693 = vmatpush1.bf16.msra.mxu0 %v511
    %694 = vmatprep.subr.bf16.mxu0 0
    %695 = vmatpush1.bf16.msra.mxu0 %v512
    %696 = vmatprep.subr.bf16.mxu0 0
    %697 = vmatpush1.bf16.msra.mxu0 %v513
    %698 = vmatprep.subr.bf16.mxu0 0
    %699 = vmatpush1.bf16.msra.mxu0 %v514
    %700 = vmatprep.subr.bf16.mxu0 0
    %701 = vmatpush1.bf16.msra.mxu0 %v515
    %702 = vmatprep.subr.bf16.mxu0 0
    %703 = vmatpush1.bf16.msra.mxu0 %v516
    %704 = vmatprep.subr.bf16.mxu0 0
    %705 = vmatpush1.bf16.msra.mxu0 %v517
    %706 = vmatprep.subr.bf16.mxu0 0
    %707 = vmatpush1.bf16.msra.mxu0 %v518
    %708 = vmatprep.subr.bf16.mxu0 0
    %709 = vmatpush1.bf16.msra.mxu0 %v519
    %710 = vmatprep.subr.bf16.mxu0 0
    %711 = vmatpush1.bf16.msra.mxu0 %v520
    %712 = vmatprep.subr.bf16.mxu0 0
    %713 = vmatpush1.bf16.msra.mxu0 %v521
    %714 = vmatprep.subr.bf16.mxu0 0
    %715 = vmatpush1.bf16.msra.mxu0 %v522
    %716 = vmatprep.subr.bf16.mxu0 0
    %717 = vmatpush1.bf16.msra.mxu0 %v523
    %718 = vmatprep.mubr.bf16.mxu0 %v82
    %719 = vmatmul.mubr.bf16.gmra.mrb[0].mxu0 %v81
    %v720 = vpop.f32.mrb[0].mxu0
    %v721 = vadd.f32 %v680, %v720
    %v722 = vpop.f32.mrb[0].mxu0
    %v723 = vpop.f32.mrb[0].mxu0
    %v724 = vadd.f32 %v683, %v723
    %v725 = vpop.f32.mrb[0].mxu0
    %726 = vdwg.mxu0
    %727 = vmatprep.subr.bf16.mxu0 0
    %728 = vmatpush1.bf16.msra.mxu0 %v524
    %729 = vmatprep.subr.bf16.mxu0 0
    %730 = vmatpush1.bf16.msra.mxu0 %v525
    %731 = vmatprep.subr.bf16.mxu0 0
    %732 = vmatpush1.bf16.msra.mxu0 %v526
    %733 = vmatprep.subr.bf16.mxu0 0
    %734 = vmatpush1.bf16.msra.mxu0 %v527
    %735 = vmatprep.subr.bf16.mxu0 0
    %736 = vmatpush1.bf16.msra.mxu0 %v528
    %737 = vmatprep.subr.bf16.mxu0 0
    %738 = vmatpush1.bf16.msra.mxu0 %v529
    %739 = vmatprep.subr.bf16.mxu0 0
    %740 = vmatpush1.bf16.msra.mxu0 %v530
    %741 = vmatprep.subr.bf16.mxu0 0
    %742 = vmatpush1.bf16.msra.mxu0 %v531
    %743 = vmatprep.subr.bf16.mxu0 0
    %744 = vmatpush1.bf16.msra.mxu0 %v532
    %745 = vmatprep.subr.bf16.mxu0 0
    %746 = vmatpush1.bf16.msra.mxu0 %v533
    %747 = vmatprep.subr.bf16.mxu0 0
    %748 = vmatpush1.bf16.msra.mxu0 %v534
    %749 = vmatprep.subr.bf16.mxu0 0
    %750 = vmatpush1.bf16.msra.mxu0 %v535
    %751 = vmatprep.subr.bf16.mxu0 0
    %752 = vmatpush1.bf16.msra.mxu0 %v536
    %753 = vmatprep.subr.bf16.mxu0 0
    %754 = vmatpush1.bf16.msra.mxu0 %v537
    %755 = vmatprep.subr.bf16.mxu0 0
    %756 = vmatpush1.bf16.msra.mxu0 %v538
    %757 = vmatprep.subr.bf16.mxu0 0
    %758 = vmatpush1.bf16.msra.mxu0 %v539
    %759 = vmatprep.mubr.bf16.mxu0 %v84
    %760 = vmatmul.mubr.bf16.gmra.mrb[0].mxu0 %v83
    %v761 = vpop.f32.mrb[0].mxu0
    %v762 = vadd.f32 %v721, %v761
    %v763 = vpop.f32.mrb[0].mxu0
    %v764 = vpop.f32.mrb[0].mxu0
    %v765 = vadd.f32 %v724, %v764
    %v766 = vpop.f32.mrb[0].mxu0
    %767 = vdwg.mxu0
    %v768 = vmax.f32 %v762, 0.0
    %v769 = vmax.f32 %v765, 0.0
    %v770 = vpack.c.bf16 %v769, %v768
    %v771 = vld [vmem:[%s5] sm:$0xf]
    %v772 = vld [vmem:[%s5 + $0x4] sm:$0xf]
    %v773 = vld [vmem:[%s5 + $0x8] sm:$0xf]
    %v774 = vld [vmem:[%s5 + $0xc] sm:$0xf]
    %v775 = vld [vmem:[%s6] sm:$0x1]
    %v777 = vlaneseq
    %v778 = vshrl.u32 %v777, 7
    %v779 = vsub.s32 0, %v778
    %v780 = vrot.slane %v775, %v779
    %v786 = vunpack.c.l.b16 %v771
    %v787 = vunpack.c.l.b16 %v772
    %v788 = vunpack.c.l.b16 %v773
    %v789 = vunpack.c.l.b16 %v774
    %v790 = vpack.c.b16 %v787, %v786
    %v791 = vpack.c.b16 %v789, %v788
    %vm794 = vcmask 261120
    %v796 = vsel %vm794, %v770, 0
    %798 = vmatprep.subr.bf16.mxu0 0
    %799 = vmatpush1.bf16.msra.mxu0 %v790
    %800 = vmatprep.subr.bf16.mxu0 0
    %801 = vmatpush1.bf16.msra.mxu0 %v791
    %802 = vmatprep.subr.bf16.mxu0 0
    %803 = vmatpush1.bf16.msra.mxu0 0
    %804 = vmatprep.subr.bf16.mxu0 0
    %805 = vmatpush1.bf16.msra.mxu0 0
    %806 = vmatprep.subr.bf16.mxu0 0
    %807 = vmatpush1.bf16.msra.mxu0 0
    %808 = vmatprep.subr.bf16.mxu0 0
    %809 = vmatpush1.bf16.msra.mxu0 0
    %810 = vmatprep.subr.bf16.mxu0 0
    %811 = vmatpush1.bf16.msra.mxu0 0
    %812 = vmatprep.subr.bf16.mxu0 0
    %813 = vmatpush1.bf16.msra.mxu0 0
    %814 = vmatprep.subr.bf16.mxu0 0
    %815 = vmatpush1.bf16.msra.mxu0 0
    %816 = vmatprep.subr.bf16.mxu0 0
    %817 = vmatpush1.bf16.msra.mxu0 0
    %818 = vmatprep.subr.bf16.mxu0 0
    %819 = vmatpush1.bf16.msra.mxu0 0
    %820 = vmatprep.subr.bf16.mxu0 0
    %821 = vmatpush1.bf16.msra.mxu0 0
    %822 = vmatprep.subr.bf16.mxu0 0
    %823 = vmatpush1.bf16.msra.mxu0 0
    %824 = vmatprep.subr.bf16.mxu0 0
    %825 = vmatpush1.bf16.msra.mxu0 0
    %826 = vmatprep.subr.bf16.mxu0 0
    %827 = vmatpush1.bf16.msra.mxu0 0
    %828 = vmatprep.subr.bf16.mxu0 0
    %829 = vmatpush1.bf16.msra.mxu0 0
    %830 = vmatprep.mubr.bf16.mxu0 0
    %831 = vmatmul.mubr.bf16.gmra.mrb[0].mxu0 %v796
    %v832 = vpop.f32.mrb[0].mxu0
    %v833 = vadd.f32 %v780, %v832
    %v834 = vpop.f32.mrb[0].mxu0
    %v835 = vpop.f32.mrb[0].mxu0
    %v836 = vadd.f32 %v780, %v835
    %v837 = vpop.f32.mrb[0].mxu0
    %838 = vdwg.mxu0
    %v839 = vmul.f32 %v833, 0.5
    %v840 = vmul.f32 %v836, 0.5
    %v841 = vmul.f32 %v839, 1.442695
    %v842 = vpow.pop %v841
    %v843 = vmul.f32 %v840, 1.442695
    %v844 = vpow.pop %v843
    %v845 = vld [vmem:[%s2] sm:$0xff]
    %v846 = vld [vmem:[%s2 + $0x8] sm:$0xff]
    %849 = vrot.lane.b32.xlu0 %v842, 112
    %v850 = vpop.permute.xlu0 %849
    %851 = vrot.lane.b32.xlu0 %v844, 112
    %v852 = vpop.permute.xlu0 %851
    %v855 = vmul.f32 %v845, %v850
    %v856 = vmul.f32 %v846, %v852
    %v857 = vadd.f32 %v833, %v855
    %v858 = vadd.f32 %v836, %v856
    %v859 = vpack.c.bf16 %v858, %v857
    %v860 = vld [vmem:[%s7] sm:$0xf]
    %v861 = vld [vmem:[%s7 + $0x4] sm:$0xf]
    %v862 = vld [vmem:[%s8] sm:$0x1]
    %v864 = vlaneseq
    %v865 = vshrl.u32 %v864, 7
    %v866 = vsub.s32 0, %v865
    %v867 = vrot.slane %v862, %v866
    %v871 = vunpack.c.l.b16 %v860
    %v872 = vunpack.c.l.b16 %v861
    %v873 = vpack.c.b16 %v872, %v871
    %vm875 = vcmask 130048
    %v877 = vsel %vm875, %v859, 0
    %879 = vmatprep.subr.bf16.mxu0 0
    %880 = vmatpush1.bf16.msra.mxu0 %v873
    %881 = vmatprep.subr.bf16.mxu0 0
    %882 = vmatpush1.bf16.msra.mxu0 0
    %883 = vmatprep.subr.bf16.mxu0 0
    %884 = vmatpush1.bf16.msra.mxu0 0
    %885 = vmatprep.subr.bf16.mxu0 0
    %886 = vmatpush1.bf16.msra.mxu0 0
    %887 = vmatprep.subr.bf16.mxu0 0
    %888 = vmatpush1.bf16.msra.mxu0 0
    %889 = vmatprep.subr.bf16.mxu0 0
    %890 = vmatpush1.bf16.msra.mxu0 0
    %891 = vmatprep.subr.bf16.mxu0 0
    %892 = vmatpush1.bf16.msra.mxu0 0
    %893 = vmatprep.subr.bf16.mxu0 0
    %894 = vmatpush1.bf16.msra.mxu0 0
    %895 = vmatprep.subr.bf16.mxu0 0
    %896 = vmatpush1.bf16.msra.mxu0 0
    %897 = vmatprep.subr.bf16.mxu0 0
    %898 = vmatpush1.bf16.msra.mxu0 0
    %899 = vmatprep.subr.bf16.mxu0 0
    %900 = vmatpush1.bf16.msra.mxu0 0
    %901 = vmatprep.subr.bf16.mxu0 0
    %902 = vmatpush1.bf16.msra.mxu0 0
    %903 = vmatprep.subr.bf16.mxu0 0
    %904 = vmatpush1.bf16.msra.mxu0 0
    %905 = vmatprep.subr.bf16.mxu0 0
    %906 = vmatpush1.bf16.msra.mxu0 0
    %907 = vmatprep.subr.bf16.mxu0 0
    %908 = vmatpush1.bf16.msra.mxu0 0
    %909 = vmatprep.subr.bf16.mxu0 0
    %910 = vmatpush1.bf16.msra.mxu0 0
    %911 = vmatprep.mubr.bf16.mxu0 0
    %912 = vmatmul.mubr.bf16.gmra.mrb[0].mxu0 %v877
    %v913 = vpop.f32.mrb[0].mxu0
    %v914 = vadd.f32 %v867, %v913
    %v915 = vpop.f32.mrb[0].mxu0
    %v916 = vpop.f32.mrb[0].mxu0
    %v917 = vadd.f32 %v867, %v916
    %v918 = vpop.f32.mrb[0].mxu0
    %919 = vdwg.mxu0
    %v920 = vmax.f32 %v914, 0.0
    %v921 = vmax.f32 %v917, 0.0
    %v922 = vpack.c.bf16 %v921, %v920
    %v923 = vld [vmem:[%s9] sm:$0xff]
    %v924 = vld [vmem:[%s9 + $0x8] sm:$0xff]
    %v925 = vld [vmem:[%s9 + $0x10] sm:$0xff]
    %v926 = vld [vmem:[%s9 + $0x18] sm:$0xff]
    %v927 = vld [vmem:[%s9 + $0x20] sm:$0xff]
    %v928 = vld [vmem:[%s9 + $0x28] sm:$0xff]
    %v929 = vld [vmem:[%s9 + $0x30] sm:$0xff]
    %v930 = vld [vmem:[%s9 + $0x38] sm:$0xff]
    %v931 = vld [vmem:[%s9 + $0x40] sm:$0xff]
    %v932 = vld [vmem:[%s9 + $0x48] sm:$0xff]
    %v933 = vld [vmem:[%s9 + $0x50] sm:$0xff]
    %v934 = vld [vmem:[%s9 + $0x58] sm:$0xff]
    %v935 = vld [vmem:[%s9 + $0x60] sm:$0xff]
    %v936 = vld [vmem:[%s9 + $0x68] sm:$0xff]
    %v937 = vld [vmem:[%s9 + $0x70] sm:$0xff]
    %v938 = vld [vmem:[%s9 + $0x78] sm:$0xff]
    %v939 = vld [vmem:[%s10] sm:$0xff]
    %v941 = vlaneseq
    %v942 = vshrl.u32 %v941, 7
    %v943 = vsub.s32 0, %v942
    %v944 = vrot.slane %v939, %v943
    %v945 = vlaneseq
    %v946 = vshrl.u32 %v945, 7
    %v947 = vsub.s32 1, %v946
    %v948 = vrot.slane %v939, %v947
    %v949 = vlaneseq
    %v950 = vshrl.u32 %v949, 7
    %v951 = vsub.s32 2, %v950
    %v952 = vrot.slane %v939, %v951
    %v953 = vlaneseq
    %v954 = vshrl.u32 %v953, 7
    %v955 = vsub.s32 3, %v954
    %v956 = vrot.slane %v939, %v955
    %v957 = vlaneseq
    %v958 = vshrl.u32 %v957, 7
    %v959 = vsub.s32 4, %v958
    %v960 = vrot.slane %v939, %v959
    %v961 = vlaneseq
    %v962 = vshrl.u32 %v961, 7
    %v963 = vsub.s32 5, %v962
    %v964 = vrot.slane %v939, %v963
    %v965 = vlaneseq
    %v966 = vshrl.u32 %v965, 7
    %v967 = vsub.s32 6, %v966
    %v968 = vrot.slane %v939, %v967
    %v969 = vlaneseq
    %v970 = vshrl.u32 %v969, 7
    %v971 = vsub.s32 7, %v970
    %v972 = vrot.slane %v939, %v971
    %v997 = vunpack.c.l.b16 %v923
    %v998 = vunpack.c.h.b16 %v923
    %v999 = vunpack.c.l.b16 %v924
    %v1000 = vunpack.c.h.b16 %v924
    %v1001 = vunpack.c.l.b16 %v925
    %v1002 = vunpack.c.h.b16 %v925
    %v1003 = vunpack.c.l.b16 %v926
    %v1004 = vunpack.c.h.b16 %v926
    %v1005 = vunpack.c.l.b16 %v927
    %v1006 = vunpack.c.h.b16 %v927
    %v1007 = vunpack.c.l.b16 %v928
    %v1008 = vunpack.c.h.b16 %v928
    %v1009 = vunpack.c.l.b16 %v929
    %v1010 = vunpack.c.h.b16 %v929
    %v1011 = vunpack.c.l.b16 %v930
    %v1012 = vunpack.c.h.b16 %v930
    %v1013 = vunpack.c.l.b16 %v931
    %v1014 = vunpack.c.h.b16 %v931
    %v1015 = vunpack.c.l.b16 %v932
    %v1016 = vunpack.c.h.b16 %v932
    %v1017 = vunpack.c.l.b16 %v933
    %v1018 = vunpack.c.h.b16 %v933
    %v1019 = vunpack.c.l.b16 %v934
    %v1020 = vunpack.c.h.b16 %v934
    %v1021 = vunpack.c.l.b16 %v935
    %v1022 = vunpack.c.h.b16 %v935
    %v1023 = vunpack.c.l.b16 %v936
    %v1024 = vunpack.c.h.b16 %v936
    %v1025 = vunpack.c.l.b16 %v937
    %v1026 = vunpack.c.h.b16 %v937
    %v1027 = vunpack.c.l.b16 %v938
    %v1028 = vunpack.c.h.b16 %v938
    %v1029 = vpack.c.b16 %v1005, %v997
    %v1030 = vpack.c.b16 %v1006, %v998
    %v1031 = vpack.c.b16 %v1007, %v999
    %v1032 = vpack.c.b16 %v1008, %v1000
    %v1033 = vpack.c.b16 %v1009, %v1001
    %v1034 = vpack.c.b16 %v1010, %v1002
    %v1035 = vpack.c.b16 %v1011, %v1003
    %v1036 = vpack.c.b16 %v1012, %v1004
    %v1037 = vpack.c.b16 %v1021, %v1013
    %v1038 = vpack.c.b16 %v1022, %v1014
    %v1039 = vpack.c.b16 %v1023, %v1015
    %v1040 = vpack.c.b16 %v1024, %v1016
    %v1041 = vpack.c.b16 %v1025, %v1017
    %v1042 = vpack.c.b16 %v1026, %v1018
    %v1043 = vpack.c.b16 %v1027, %v1019
    %v1044 = vpack.c.b16 %v1028, %v1020
    %v1062 = vsel %vm794, %v922, 0
    %1064 = vmatprep.subr.bf16.mxu0 %v1030
    %1065 = vmatpush1.bf16.msra.mxu0 %v1029
    %1066 = vmatprep.subr.bf16.mxu0 %v1038
    %1067 = vmatpush1.bf16.msra.mxu0 %v1037
    %1068 = vmatprep.subr.bf16.mxu0 0
    %1069 = vmatpush1.bf16.msra.mxu0 0
    %1070 = vmatprep.subr.bf16.mxu0 0
    %1071 = vmatpush1.bf16.msra.mxu0 0
    %1072 = vmatprep.subr.bf16.mxu0 0
    %1073 = vmatpush1.bf16.msra.mxu0 0
    %1074 = vmatprep.subr.bf16.mxu0 0
    %1075 = vmatpush1.bf16.msra.mxu0 0
    %1076 = vmatprep.subr.bf16.mxu0 0
    %1077 = vmatpush1.bf16.msra.mxu0 0
    %1078 = vmatprep.subr.bf16.mxu0 0
    %1079 = vmatpush1.bf16.msra.mxu0 0
    %1080 = vmatprep.subr.bf16.mxu0 0
    %1081 = vmatpush1.bf16.msra.mxu0 0
    %1082 = vmatprep.subr.bf16.mxu0 0
    %1083 = vmatpush1.bf16.msra.mxu0 0
    %1084 = vmatprep.subr.bf16.mxu0 0
    %1085 = vmatpush1.bf16.msra.mxu0 0
    %1086 = vmatprep.subr.bf16.mxu0 0
    %1087 = vmatpush1.bf16.msra.mxu0 0
    %1088 = vmatprep.subr.bf16.mxu0 0
    %1089 = vmatpush1.bf16.msra.mxu0 0
    %1090 = vmatprep.subr.bf16.mxu0 0
    %1091 = vmatpush1.bf16.msra.mxu0 0
    %1092 = vmatprep.subr.bf16.mxu0 0
    %1093 = vmatpush1.bf16.msra.mxu0 0
    %1094 = vmatprep.subr.bf16.mxu0 0
    %1095 = vmatpush1.bf16.msra.mxu0 0
    %1096 = vmatprep.mubr.bf16.mxu0 0
    %1097 = vmatmul.mubr.bf16.gmra.mrb[0].mxu0 %v1062
    %v1098 = vpop.f32.mrb[0].mxu0
    %v1099 = vadd.f32 %v944, %v1098
    %v1100 = vpop.f32.mrb[0].mxu0
    %v1101 = vadd.f32 %v948, %v1100
    %v1102 = vpop.f32.mrb[0].mxu0
    %v1103 = vadd.f32 %v944, %v1102
    %v1104 = vpop.f32.mrb[0].mxu0
    %v1105 = vadd.f32 %v948, %v1104
    %1106 = vdwg.mxu0
    %1107 = vmatprep.subr.bf16.mxu0 %v1032
    %1108 = vmatpush1.bf16.msra.mxu0 %v1031
    %1109 = vmatprep.subr.bf16.mxu0 %v1040
    %1110 = vmatpush1.bf16.msra.mxu0 %v1039
    %1111 = vmatprep.subr.bf16.mxu0 0
    %1112 = vmatpush1.bf16.msra.mxu0 0
    %1113 = vmatprep.subr.bf16.mxu0 0
    %1114 = vmatpush1.bf16.msra.mxu0 0
    %1115 = vmatprep.subr.bf16.mxu0 0
    %1116 = vmatpush1.bf16.msra.mxu0 0
    %1117 = vmatprep.subr.bf16.mxu0 0
    %1118 = vmatpush1.bf16.msra.mxu0 0
    %1119 = vmatprep.subr.bf16.mxu0 0
    %1120 = vmatpush1.bf16.msra.mxu0 0
    %1121 = vmatprep.subr.bf16.mxu0 0
    %1122 = vmatpush1.bf16.msra.mxu0 0
    %1123 = vmatprep.subr.bf16.mxu0 0
    %1124 = vmatpush1.bf16.msra.mxu0 0
    %1125 = vmatprep.subr.bf16.mxu0 0
    %1126 = vmatpush1.bf16.msra.mxu0 0
    %1127 = vmatprep.subr.bf16.mxu0 0
    %1128 = vmatpush1.bf16.msra.mxu0 0
    %1129 = vmatprep.subr.bf16.mxu0 0
    %1130 = vmatpush1.bf16.msra.mxu0 0
    %1131 = vmatprep.subr.bf16.mxu0 0
    %1132 = vmatpush1.bf16.msra.mxu0 0
    %1133 = vmatprep.subr.bf16.mxu0 0
    %1134 = vmatpush1.bf16.msra.mxu0 0
    %1135 = vmatprep.subr.bf16.mxu0 0
    %1136 = vmatpush1.bf16.msra.mxu0 0
    %1137 = vmatprep.subr.bf16.mxu0 0
    %1138 = vmatpush1.bf16.msra.mxu0 0
    %1139 = vmatprep.mubr.bf16.mxu0 0
    %1140 = vmatmul.mubr.bf16.gmra.mrb[0].mxu0 %v1062
    %v1141 = vpop.f32.mrb[0].mxu0
    %v1142 = vadd.f32 %v952, %v1141
    %v1143 = vpop.f32.mrb[0].mxu0
    %v1144 = vadd.f32 %v956, %v1143
    %v1145 = vpop.f32.mrb[0].mxu0
    %v1146 = vadd.f32 %v952, %v1145
    %v1147 = vpop.f32.mrb[0].mxu0
    %v1148 = vadd.f32 %v956, %v1147
    %1149 = vdwg.mxu0
    %1150 = vmatprep.subr.bf16.mxu0 %v1034
    %1151 = vmatpush1.bf16.msra.mxu0 %v1033
    %1152 = vmatprep.subr.bf16.mxu0 %v1042
    %1153 = vmatpush1.bf16.msra.mxu0 %v1041
    %1154 = vmatprep.subr.bf16.mxu0 0
    %1155 = vmatpush1.bf16.msra.mxu0 0
    %1156 = vmatprep.subr.bf16.mxu0 0
    %1157 = vmatpush1.bf16.msra.mxu0 0
    %1158 = vmatprep.subr.bf16.mxu0 0
    %1159 = vmatpush1.bf16.msra.mxu0 0
    %1160 = vmatprep.subr.bf16.mxu0 0
    %1161 = vmatpush1.bf16.msra.mxu0 0
    %1162 = vmatprep.subr.bf16.mxu0 0
    %1163 = vmatpush1.bf16.msra.mxu0 0
    %1164 = vmatprep.subr.bf16.mxu0 0
    %1165 = vmatpush1.bf16.msra.mxu0 0
    %1166 = vmatprep.subr.bf16.mxu0 0
    %1167 = vmatpush1.bf16.msra.mxu0 0
    %1168 = vmatprep.subr.bf16.mxu0 0
    %1169 = vmatpush1.bf16.msra.mxu0 0
    %1170 = vmatprep.subr.bf16.mxu0 0
    %1171 = vmatpush1.bf16.msra.mxu0 0
    %1172 = vmatprep.subr.bf16.mxu0 0
    %1173 = vmatpush1.bf16.msra.mxu0 0
    %1174 = vmatprep.subr.bf16.mxu0 0
    %1175 = vmatpush1.bf16.msra.mxu0 0
    %1176 = vmatprep.subr.bf16.mxu0 0
    %1177 = vmatpush1.bf16.msra.mxu0 0
    %1178 = vmatprep.subr.bf16.mxu0 0
    %1179 = vmatpush1.bf16.msra.mxu0 0
    %1180 = vmatprep.subr.bf16.mxu0 0
    %1181 = vmatpush1.bf16.msra.mxu0 0
    %1182 = vmatprep.mubr.bf16.mxu0 0
    %1183 = vmatmul.mubr.bf16.gmra.mrb[0].mxu0 %v1062
    %v1184 = vpop.f32.mrb[0].mxu0
    %v1185 = vadd.f32 %v960, %v1184
    %v1186 = vpop.f32.mrb[0].mxu0
    %v1187 = vadd.f32 %v964, %v1186
    %v1188 = vpop.f32.mrb[0].mxu0
    %v1189 = vadd.f32 %v960, %v1188
    %v1190 = vpop.f32.mrb[0].mxu0
    %v1191 = vadd.f32 %v964, %v1190
    %1192 = vdwg.mxu0
    %1193 = vmatprep.subr.bf16.mxu0 %v1036
    %1194 = vmatpush1.bf16.msra.mxu0 %v1035
    %1195 = vmatprep.subr.bf16.mxu0 %v1044
    %1196 = vmatpush1.bf16.msra.mxu0 %v1043
    %1197 = vmatprep.subr.bf16.mxu0 0
    %1198 = vmatpush1.bf16.msra.mxu0 0
    %1199 = vmatprep.subr.bf16.mxu0 0
    %1200 = vmatpush1.bf16.msra.mxu0 0
    %1201 = vmatprep.subr.bf16.mxu0 0
    %1202 = vmatpush1.bf16.msra.mxu0 0
    %1203 = vmatprep.subr.bf16.mxu0 0
    %1204 = vmatpush1.bf16.msra.mxu0 0
    %1205 = vmatprep.subr.bf16.mxu0 0
    %1206 = vmatpush1.bf16.msra.mxu0 0
    %1207 = vmatprep.subr.bf16.mxu0 0
    %1208 = vmatpush1.bf16.msra.mxu0 0
    %1209 = vmatprep.subr.bf16.mxu0 0
    %1210 = vmatpush1.bf16.msra.mxu0 0
    %1211 = vmatprep.subr.bf16.mxu0 0
    %1212 = vmatpush1.bf16.msra.mxu0 0
    %1213 = vmatprep.subr.bf16.mxu0 0
    %1214 = vmatpush1.bf16.msra.mxu0 0
    %1215 = vmatprep.subr.bf16.mxu0 0
    %1216 = vmatpush1.bf16.msra.mxu0 0
    %1217 = vmatprep.subr.bf16.mxu0 0
    %1218 = vmatpush1.bf16.msra.mxu0 0
    %1219 = vmatprep.subr.bf16.mxu0 0
    %1220 = vmatpush1.bf16.msra.mxu0 0
    %1221 = vmatprep.subr.bf16.mxu0 0
    %1222 = vmatpush1.bf16.msra.mxu0 0
    %1223 = vmatprep.subr.bf16.mxu0 0
    %1224 = vmatpush1.bf16.msra.mxu0 0
    %1225 = vmatprep.mubr.bf16.mxu0 0
    %1226 = vmatmul.mubr.bf16.gmra.mrb[0].mxu0 %v1062
    %v1227 = vpop.f32.mrb[0].mxu0
    %v1228 = vadd.f32 %v968, %v1227
    %v1229 = vpop.f32.mrb[0].mxu0
    %v1230 = vadd.f32 %v972, %v1229
    %v1231 = vpop.f32.mrb[0].mxu0
    %v1232 = vadd.f32 %v968, %v1231
    %v1233 = vpop.f32.mrb[0].mxu0
    %v1234 = vadd.f32 %v972, %v1233
    %1235 = vdwg.mxu0
    %1236 = vst [vmem:[#allocation6] sm:$0xff] %v1099
    %1237 = vst [vmem:[#allocation6 + $0x8] sm:$0xff] %v1101
    %1238 = vst [vmem:[#allocation6 + $0x10] sm:$0xff] %v1142
    %1239 = vst [vmem:[#allocation6 + $0x18] sm:$0xff] %v1144
    %1240 = vst [vmem:[#allocation6 + $0x20] sm:$0xff] %v1185
    %1241 = vst [vmem:[#allocation6 + $0x28] sm:$0xff] %v1187
    %1242 = vst [vmem:[#allocation6 + $0x30] sm:$0xff] %v1228
    %1243 = vst [vmem:[#allocation6 + $0x38] sm:$0xff] %v1230
    %1244 = vst [vmem:[#allocation6 + $0x40] sm:$0xff] %v1103
    %1245 = vst [vmem:[#allocation6 + $0x48] sm:$0xff] %v1105
    %1246 = vst [vmem:[#allocation6 + $0x50] sm:$0xff] %v1146
    %1247 = vst [vmem:[#allocation6 + $0x58] sm:$0xff] %v1148
    %1248 = vst [vmem:[#allocation6 + $0x60] sm:$0xff] %v1189
    %1249 = vst [vmem:[#allocation6 + $0x68] sm:$0xff] %v1191
    %1250 = vst [vmem:[#allocation6 + $0x70] sm:$0xff] %v1232
    %1251 = vst [vmem:[#allocation6 + $0x78] sm:$0xff] %v1234
    %v1252 = vmul.f32 %v1099, 0.1
    %v1253 = vmul.f32 %v1101, 0.1
    %v1254 = vmul.f32 %v1142, 0.1
    %v1255 = vmul.f32 %v1144, 0.1
    %v1256 = vmul.f32 %v1185, 0.1
    %v1257 = vmul.f32 %v1187, 0.1
    %v1258 = vmul.f32 %v1228, 0.1
    %v1259 = vmul.f32 %v1230, 0.1
    %v1260 = vmul.f32 %v1103, 0.1
    %v1261 = vmul.f32 %v1105, 0.1
    %v1262 = vmul.f32 %v1146, 0.1
    %v1263 = vmul.f32 %v1148, 0.1
    %v1264 = vmul.f32 %v1189, 0.1
    %v1265 = vmul.f32 %v1191, 0.1
    %v1266 = vmul.f32 %v1232, 0.1
    %v1267 = vmul.f32 %v1234, 0.1
    %v1268 = vmul.f32 %v45, 0.9
    %v1269 = vmul.f32 %v46, 0.9
    %v1270 = vmul.f32 %v47, 0.9
    %v1271 = vmul.f32 %v48, 0.9
    %v1272 = vmul.f32 %v49, 0.9
    %v1273 = vmul.f32 %v50, 0.9
    %v1274 = vmul.f32 %v51, 0.9
    %v1275 = vmul.f32 %v52, 0.9
    %v1276 = vmul.f32 %v53, 0.9
    %v1277 = vmul.f32 %v54, 0.9
    %v1278 = vmul.f32 %v55, 0.9
    %v1279 = vmul.f32 %v56, 0.9
    %v1280 = vmul.f32 %v57, 0.9
    %v1281 = vmul.f32 %v58, 0.9
    %v1282 = vmul.f32 %v59, 0.9
    %v1283 = vmul.f32 %v60, 0.9
    %v1284 = vadd.f32 %v1252, %v1268
    %v1285 = vadd.f32 %v1253, %v1269
    %v1286 = vadd.f32 %v1254, %v1270
    %v1287 = vadd.f32 %v1255, %v1271
    %v1288 = vadd.f32 %v1256, %v1272
    %v1289 = vadd.f32 %v1257, %v1273
    %v1290 = vadd.f32 %v1258, %v1274
    %v1291 = vadd.f32 %v1259, %v1275
    %v1292 = vadd.f32 %v1260, %v1276
    %v1293 = vadd.f32 %v1261, %v1277
    %v1294 = vadd.f32 %v1262, %v1278
    %v1295 = vadd.f32 %v1263, %v1279
    %v1296 = vadd.f32 %v1264, %v1280
    %v1297 = vadd.f32 %v1265, %v1281
    %v1298 = vadd.f32 %v1266, %v1282
    %v1299 = vadd.f32 %v1267, %v1283
    %1300 = vst [vmem:[#allocation5] sm:$0xff] %v1284
    %1301 = vst [vmem:[#allocation5 + $0x8] sm:$0xff] %v1285
    %1302 = vst [vmem:[#allocation5 + $0x10] sm:$0xff] %v1286
    %1303 = vst [vmem:[#allocation5 + $0x18] sm:$0xff] %v1287
    %1304 = vst [vmem:[#allocation5 + $0x20] sm:$0xff] %v1288
    %1305 = vst [vmem:[#allocation5 + $0x28] sm:$0xff] %v1289
    %1306 = vst [vmem:[#allocation5 + $0x30] sm:$0xff] %v1290
    %1307 = vst [vmem:[#allocation5 + $0x38] sm:$0xff] %v1291
    %1308 = vst [vmem:[#allocation5 + $0x40] sm:$0xff] %v1292
    %1309 = vst [vmem:[#allocation5 + $0x48] sm:$0xff] %v1293
    %1310 = vst [vmem:[#allocation5 + $0x50] sm:$0xff] %v1294
    %1311 = vst [vmem:[#allocation5 + $0x58] sm:$0xff] %v1295
    %1312 = vst [vmem:[#allocation5 + $0x60] sm:$0xff] %v1296
    %1313 = vst [vmem:[#allocation5 + $0x68] sm:$0xff] %v1297
    %1314 = vst [vmem:[#allocation5 + $0x70] sm:$0xff] %v1298
    %1315 = vst [vmem:[#allocation5 + $0x78] sm:$0xff] %v1299
    %v1316 = vsub.f32 %v1099, %v61
    %v1317 = vsub.f32 %v1101, %v62
    %v1318 = vsub.f32 %v1142, %v63
    %v1319 = vsub.f32 %v1144, %v64
    %v1320 = vsub.f32 %v1185, %v65
    %v1321 = vsub.f32 %v1187, %v66
    %v1322 = vsub.f32 %v1228, %v67
    %v1323 = vsub.f32 %v1230, %v68
    %v1324 = vsub.f32 %v1103, %v69
    %v1325 = vsub.f32 %v1105, %v70
    %v1326 = vsub.f32 %v1146, %v71
    %v1327 = vsub.f32 %v1148, %v72
    %v1328 = vsub.f32 %v1189, %v73
    %v1329 = vsub.f32 %v1191, %v74
    %v1330 = vsub.f32 %v1232, %v75
    %v1331 = vsub.f32 %v1234, %v76
    %v1332 = vmul.f32 %v45, %v45
    %v1333 = vmul.f32 %v46, %v46
    %v1334 = vmul.f32 %v47, %v47
    %v1335 = vmul.f32 %v48, %v48
    %v1336 = vmul.f32 %v49, %v49
    %v1337 = vmul.f32 %v50, %v50
    %v1338 = vmul.f32 %v51, %v51
    %v1339 = vmul.f32 %v52, %v52
    %v1340 = vmul.f32 %v53, %v53
    %v1341 = vmul.f32 %v54, %v54
    %v1342 = vmul.f32 %v55, %v55
    %v1343 = vmul.f32 %v56, %v56
    %v1344 = vmul.f32 %v57, %v57
    %v1345 = vmul.f32 %v58, %v58
    %v1346 = vmul.f32 %v59, %v59
    %v1347 = vmul.f32 %v60, %v60
    %v1348 = vmul.f32 %v1099, %v1099
    %v1349 = vmul.f32 %v1101, %v1101
    %v1350 = vmul.f32 %v1142, %v1142
    %v1351 = vmul.f32 %v1144, %v1144
    %v1352 = vmul.f32 %v1185, %v1185
    %v1353 = vmul.f32 %v1187, %v1187
    %v1354 = vmul.f32 %v1228, %v1228
    %v1355 = vmul.f32 %v1230, %v1230
    %v1356 = vmul.f32 %v1103, %v1103
    %v1357 = vmul.f32 %v1105, %v1105
    %v1358 = vmul.f32 %v1146, %v1146
    %v1359 = vmul.f32 %v1148, %v1148
    %v1360 = vmul.f32 %v1189, %v1189
    %v1361 = vmul.f32 %v1191, %v1191
    %v1362 = vmul.f32 %v1232, %v1232
    %v1363 = vmul.f32 %v1234, %v1234
    %v1364 = vmul.f32 %v1316, %v1316
    %v1365 = vmul.f32 %v1317, %v1317
    %v1366 = vmul.f32 %v1318, %v1318
    %v1367 = vmul.f32 %v1319, %v1319
    %v1368 = vmul.f32 %v1320, %v1320
    %v1369 = vmul.f32 %v1321, %v1321
    %v1370 = vmul.f32 %v1322, %v1322
    %v1371 = vmul.f32 %v1323, %v1323
    %v1372 = vmul.f32 %v1324, %v1324
    %v1373 = vmul.f32 %v1325, %v1325
    %v1374 = vmul.f32 %v1326, %v1326
    %v1375 = vmul.f32 %v1327, %v1327
    %v1376 = vmul.f32 %v1328, %v1328
    %v1377 = vmul.f32 %v1329, %v1329
    %v1378 = vmul.f32 %v1330, %v1330
    %v1379 = vmul.f32 %v1331, %v1331
    %v1380 = vadd.f32 %v1332, %v1333
    %v1381 = vadd.f32 %v1380, %v1334
    %v1382 = vadd.f32 %v1381, %v1335
    %v1383 = vadd.f32 %v1382, %v1336
    %v1384 = vadd.f32 %v1383, %v1337
    %v1385 = vadd.f32 %v1384, %v1338
    %v1386 = vadd.f32 %v1385, %v1339
    %1387 = vadd.xlane.f32.xlu0 %v1386
    %v1388 = vpop.xlane.xlu0 %1387
    %v1389 = vadd.f32 %v1340, %v1341
    %v1390 = vadd.f32 %v1389, %v1342
    %v1391 = vadd.f32 %v1390, %v1343
    %v1392 = vadd.f32 %v1391, %v1344
    %v1393 = vadd.f32 %v1392, %v1345
    %v1394 = vadd.f32 %v1393, %v1346
    %v1395 = vadd.f32 %v1394, %v1347
    %1396 = vadd.xlane.f32.xlu0 %v1395
    %v1397 = vpop.xlane.xlu0 %1396
    %v1398 = vadd.f32 %v1348, %v1349
    %v1399 = vadd.f32 %v1398, %v1350
    %v1400 = vadd.f32 %v1399, %v1351
    %v1401 = vadd.f32 %v1400, %v1352
    %v1402 = vadd.f32 %v1401, %v1353
    %v1403 = vadd.f32 %v1402, %v1354
    %v1404 = vadd.f32 %v1403, %v1355
    %1405 = vadd.xlane.f32.xlu0 %v1404
    %v1406 = vpop.xlane.xlu0 %1405
    %v1407 = vadd.f32 %v1356, %v1357
    %v1408 = vadd.f32 %v1407, %v1358
    %v1409 = vadd.f32 %v1408, %v1359
    %v1410 = vadd.f32 %v1409, %v1360
    %v1411 = vadd.f32 %v1410, %v1361
    %v1412 = vadd.f32 %v1411, %v1362
    %v1413 = vadd.f32 %v1412, %v1363
    %1414 = vadd.xlane.f32.xlu0 %v1413
    %v1415 = vpop.xlane.xlu0 %1414
    %v1416 = vadd.f32 %v1364, %v1365
    %v1417 = vadd.f32 %v1416, %v1366
    %v1418 = vadd.f32 %v1417, %v1367
    %v1419 = vadd.f32 %v1418, %v1368
    %v1420 = vadd.f32 %v1419, %v1369
    %v1421 = vadd.f32 %v1420, %v1370
    %v1422 = vadd.f32 %v1421, %v1371
    %1423 = vadd.xlane.f32.xlu0 %v1422
    %v1424 = vpop.xlane.xlu0 %1423
    %v1425 = vadd.f32 %v1372, %v1373
    %v1426 = vadd.f32 %v1425, %v1374
    %v1427 = vadd.f32 %v1426, %v1375
    %v1428 = vadd.f32 %v1427, %v1376
    %v1429 = vadd.f32 %v1428, %v1377
    %v1430 = vadd.f32 %v1429, %v1378
    %v1431 = vadd.f32 %v1430, %v1379
    %1432 = vadd.xlane.f32.xlu0 %v1431
    %v1433 = vpop.xlane.xlu0 %1432
    %v1434 = vmul.f32 %v1424, 0.5
    %v1435 = vmul.f32 %v1433, 0.5
    %v1436 = vadd.f32 %v833, 1.0
    %v1437 = vadd.f32 %v836, 1.0
    %v1438 = vmul.f32 %v833, %v833
    %v1439 = vmul.f32 %v836, %v836
    %1442 = vrot.lane.b32.xlu0 %v1438, 16
    %v1443 = vpop.permute.xlu0 %1442
    %1444 = vrot.lane.b32.xlu0 %v1439, 16
    %v1445 = vpop.permute.xlu0 %1444
    %v1448 = vsub.f32 %v1436, %v1443
    %v1449 = vsub.f32 %v1437, %v1445
    %v1450 = vmul.f32 %v842, %v842
    %v1451 = vmul.f32 %v844, %v844
    %v1452 = vsub.f32 %v1448, %v1450
    %v1453 = vsub.f32 %v1449, %v1451
    %1456 = vrot.lane.b32.xlu0 %v1452, 112
    %v1457 = vpop.permute.xlu0 %1456
    %1458 = vrot.lane.b32.xlu0 %v1453, 112
    %v1459 = vpop.permute.xlu0 %1458
    %v1462 = vsel %vm875, %v1457, 0.0
    %1463 = vadd.xlane.f32.xlu0 %v1462
    %v1464 = vpop.xlane.xlu0 %1463
    %v1465 = vsel %vm875, %v1459, 0.0
    %1466 = vadd.xlane.f32.xlu0 %v1465
    %v1467 = vpop.xlane.xlu0 %1466
    %v1468 = vmul.f32 %v1464, -0.5
    %v1469 = vmul.f32 %v1467, -0.5
    %v1470 = vlaneseq
    %v1471 = vshrl.u32 %v1470, 7
    %v1472 = vadd.s32 %v1471, 8
    %vm1473 = vcmp.lt.s32.totalorder %v1471, 2
    %vm1474 = vcmp.lt.s32.totalorder %v1472, 2
    %v1475 = vsel %vm1473, 1, 0
    %v1476 = vsel %vm1474, 1, 0
    %v1477 = vcvt.s32.f32 %v1475
    %v1478 = vcvt.s32.f32 %v1476
    %v1479 = vmul.f32 %v1434, %v1477
    %v1480 = vmul.f32 %v1435, %v1478
    %vm1481 = vcmask 7168
    %v1482 = vsel %vm1481, %v1479, 0.0
    %v1483 = vsel %vm1481, %v1480, 0.0
    %v1484 = vadd.f32 %v1482, %v1483
    %1485 = vadd.xlane.f32.xlu0 %v1484
    %v1486 = vpop.xlane.xlu0 %1485
    %v1487 = vrot.slane %v1486, 4
    %v1488 = vadd.f32 %v1486, %v1487
    %v1489 = vrot.slane %v1488, 2
    %v1490 = vadd.f32 %v1488, %v1489
    %v1491 = vrot.slane %v1490, 1
    %v1492 = vadd.f32 %v1490, %v1491
    %s1493 = vtos %v1492
    %s1494 = smul.f32 %s1493, 0.5
    %v1495 = vmul.f32 %v1468, %v1477
    %v1496 = vmul.f32 %v1469, %v1478
    %v1497 = vsel %vm1481, %v1495, 0.0
    %v1498 = vsel %vm1481, %v1496, 0.0
    %v1499 = vadd.f32 %v1497, %v1498
    %1500 = vadd.xlane.f32.xlu0 %v1499
    %v1501 = vpop.xlane.xlu0 %1500
    %v1502 = vrot.slane %v1501, 4
    %v1503 = vadd.f32 %v1501, %v1502
    %v1504 = vrot.slane %v1503, 2
    %v1505 = vadd.f32 %v1503, %v1504
    %v1506 = vrot.slane %v1505, 1
    %v1507 = vadd.f32 %v1505, %v1506
    %s1508 = vtos %v1507
    %s1509 = smul.f32 %s1508, 0.5
    %s1510 = sadd.f32 %s1494, %s1509
    %1511 = vmatprep.subr.mxu0 %v1101
    %1512 = vmatpush1.xpose.msra.mxu0 %v1099
    %1513 = vmatprep.subr.mxu0 %v1105
    %1514 = vmatpush1.xpose.msra.mxu0 %v1103
    %1515 = vmatprep.subr.mxu0 0.0
    %1516 = vmatpush1.xpose.msra.mxu0 0.0
    %1517 = vmatprep.subr.mxu0 0.0
    %1518 = vmatpush1.xpose.msra.mxu0 0.0
    %1519 = vmatprep.subr.mxu0 0.0
    %1520 = vmatpush1.xpose.msra.mxu0 0.0
    %1521 = vmatprep.subr.mxu0 0.0
    %1522 = vmatpush1.xpose.msra.mxu0 0.0
    %1523 = vmatprep.subr.mxu0 0.0
    %1524 = vmatpush1.xpose.msra.mxu0 0.0
    %1525 = vmatprep.subr.mxu0 0.0
    %1526 = vmatpush1.xpose.msra.mxu0 0.0
    %1527 = vmatprep.subr.mxu0 0.0
    %1528 = vmatpush1.xpose.msra.mxu0 0.0
    %1529 = vmatprep.subr.mxu0 0.0
    %1530 = vmatpush1.xpose.msra.mxu0 0.0
    %1531 = vmatprep.subr.mxu0 0.0
    %1532 = vmatpush1.xpose.msra.mxu0 0.0
    %1533 = vmatprep.subr.mxu0 0.0
    %1534 = vmatpush1.xpose.msra.mxu0 0.0
    %1535 = vmatprep.subr.mxu0 0.0
    %1536 = vmatpush1.xpose.msra.mxu0 0.0
    %1537 = vmatprep.subr.mxu0 0.0
    %1538 = vmatpush1.xpose.msra.mxu0 0.0
    %1539 = vmatprep.subr.mxu0 0.0
    %1540 = vmatpush1.xpose.msra.mxu0 0.0
    %1541 = vmatprep.subr.mxu0 0.0
    %1542 = vmatpush1.xpose.msra.mxu0 0.0
    %1543 = vmatprep.subr.mxu0 0.0
    %1544 = vmatpush1.xpose.msra.mxu0 0.0
    %1545 = vmatprep.subr.mxu0 0.0
    %1546 = vmatpush1.xpose.msra.mxu0 0.0
    %1547 = vmatprep.subr.mxu0 0.0
    %1548 = vmatpush1.xpose.msra.mxu0 0.0
    %1549 = vmatprep.subr.mxu0 0.0
    %1550 = vmatpush1.xpose.msra.mxu0 0.0
    %1551 = vmatprep.subr.mxu0 0.0
    %1552 = vmatpush1.xpose.msra.mxu0 0.0
    %1553 = vmatprep.subr.mxu0 0.0
    %1554 = vmatpush1.xpose.msra.mxu0 0.0
    %1555 = vmatprep.subr.mxu0 0.0
    %1556 = vmatpush1.xpose.msra.mxu0 0.0
    %1557 = vmatprep.subr.mxu0 0.0
    %1558 = vmatpush1.xpose.msra.mxu0 0.0
    %1559 = vmatprep.subr.mxu0 0.0
    %1560 = vmatpush1.xpose.msra.mxu0 0.0
    %1561 = vmatprep.subr.mxu0 0.0
    %1562 = vmatpush1.xpose.msra.mxu0 0.0
    %1563 = vmatprep.subr.mxu0 0.0
    %1564 = vmatpush1.xpose.msra.mxu0 0.0
    %1565 = vmatprep.subr.mxu0 0.0
    %1566 = vmatpush1.xpose.msra.mxu0 0.0
    %1567 = vmatprep.subr.mxu0 0.0
    %1568 = vmatpush1.xpose.msra.mxu0 0.0
    %1569 = vmatprep.subr.mxu0 0.0
    %1570 = vmatpush1.xpose.msra.mxu0 0.0
    %1571 = vmatprep.subr.mxu0 0.0
    %1572 = vmatpush1.xpose.msra.mxu0 0.0
    %1573 = vmatprep.subr.mxu0 0.0
    %1574 = vmatpush1.xpose.msra.mxu0 0.0
    %1575 = vmatprep.mubr.f32.mxu0 %v46
    %1576 = vmatmul.mubr.f32.gmra.mrb[0].mxu0 %v45
    %v1577 = vpop.f32.mrb[0].mxu0
    %v1578 = vadd.f32 0.0, %v1577
    %v1579 = vpop.f32.mrb[0].mxu0
    %1580 = vmatprep.mubr.f32.mxu0 %v54
    %1581 = vmatmul.mubr.f32.gmra.mrb[0].mxu0 %v53
    %v1582 = vpop.f32.mrb[0].mxu0
    %v1583 = vadd.f32 0.0, %v1582
    %v1584 = vpop.f32.mrb[0].mxu0
    %1585 = vdwg.mxu0
    %1586 = vmatprep.subr.mxu0 %v1144
    %1587 = vmatpush1.xpose.msra.mxu0 %v1142
    %1588 = vmatprep.subr.mxu0 %v1148
    %1589 = vmatpush1.xpose.msra.mxu0 %v1146
    %1590 = vmatprep.subr.mxu0 0.0
    %1591 = vmatpush1.xpose.msra.mxu0 0.0
    %1592 = vmatprep.subr.mxu0 0.0
    %1593 = vmatpush1.xpose.msra.mxu0 0.0
    %1594 = vmatprep.subr.mxu0 0.0
    %1595 = vmatpush1.xpose.msra.mxu0 0.0
    %1596 = vmatprep.subr.mxu0 0.0
    %1597 = vmatpush1.xpose.msra.mxu0 0.0
    %1598 = vmatprep.subr.mxu0 0.0
    %1599 = vmatpush1.xpose.msra.mxu0 0.0
    %1600 = vmatprep.subr.mxu0 0.0
    %1601 = vmatpush1.xpose.msra.mxu0 0.0
    %1602 = vmatprep.subr.mxu0 0.0
    %1603 = vmatpush1.xpose.msra.mxu0 0.0
    %1604 = vmatprep.subr.mxu0 0.0
    %1605 = vmatpush1.xpose.msra.mxu0 0.0
    %1606 = vmatprep.subr.mxu0 0.0
    %1607 = vmatpush1.xpose.msra.mxu0 0.0
    %1608 = vmatprep.subr.mxu0 0.0
    %1609 = vmatpush1.xpose.msra.mxu0 0.0
    %1610 = vmatprep.subr.mxu0 0.0
    %1611 = vmatpush1.xpose.msra.mxu0 0.0
    %1612 = vmatprep.subr.mxu0 0.0
    %1613 = vmatpush1.xpose.msra.mxu0 0.0
    %1614 = vmatprep.subr.mxu0 0.0
    %1615 = vmatpush1.xpose.msra.mxu0 0.0
    %1616 = vmatprep.subr.mxu0 0.0
    %1617 = vmatpush1.xpose.msra.mxu0 0.0
    %1618 = vmatprep.subr.mxu0 0.0
    %1619 = vmatpush1.xpose.msra.mxu0 0.0
    %1620 = vmatprep.subr.mxu0 0.0
    %1621 = vmatpush1.xpose.msra.mxu0 0.0
    %1622 = vmatprep.subr.mxu0 0.0
    %1623 = vmatpush1.xpose.msra.mxu0 0.0
    %1624 = vmatprep.subr.mxu0 0.0
    %1625 = vmatpush1.xpose.msra.mxu0 0.0
    %1626 = vmatprep.subr.mxu0 0.0
    %1627 = vmatpush1.xpose.msra.mxu0 0.0
    %1628 = vmatprep.subr.mxu0 0.0
    %1629 = vmatpush1.xpose.msra.mxu0 0.0
    %1630 = vmatprep.subr.mxu0 0.0
    %1631 = vmatpush1.xpose.msra.mxu0 0.0
    %1632 = vmatprep.subr.mxu0 0.0
    %1633 = vmatpush1.xpose.msra.mxu0 0.0
    %1634 = vmatprep.subr.mxu0 0.0
    %1635 = vmatpush1.xpose.msra.mxu0 0.0
    %1636 = vmatprep.subr.mxu0 0.0
    %1637 = vmatpush1.xpose.msra.mxu0 0.0
    %1638 = vmatprep.subr.mxu0 0.0
    %1639 = vmatpush1.xpose.msra.mxu0 0.0
    %1640 = vmatprep.subr.mxu0 0.0
    %1641 = vmatpush1.xpose.msra.mxu0 0.0
    %1642 = vmatprep.subr.mxu0 0.0
    %1643 = vmatpush1.xpose.msra.mxu0 0.0
    %1644 = vmatprep.subr.mxu0 0.0
    %1645 = vmatpush1.xpose.msra.mxu0 0.0
    %1646 = vmatprep.subr.mxu0 0.0
    %1647 = vmatpush1.xpose.msra.mxu0 0.0
    %1648 = vmatprep.subr.mxu0 0.0
    %1649 = vmatpush1.xpose.msra.mxu0 0.0
    %1650 = vmatprep.mubr.f32.mxu0 %v48
    %1651 = vmatmul.mubr.f32.gmra.mrb[0].mxu0 %v47
    %v1652 = vpop.f32.mrb[0].mxu0
    %v1653 = vadd.f32 %v1578, %v1652
    %v1654 = vpop.f32.mrb[0].mxu0
    %1655 = vmatprep.mubr.f32.mxu0 %v56
    %1656 = vmatmul.mubr.f32.gmra.mrb[0].mxu0 %v55
    %v1657 = vpop.f32.mrb[0].mxu0
    %v1658 = vadd.f32 %v1583, %v1657
    %v1659 = vpop.f32.mrb[0].mxu0
    %1660 = vdwg.mxu0
    %1661 = vmatprep.subr.mxu0 %v1187
    %1662 = vmatpush1.xpose.msra.mxu0 %v1185
    %1663 = vmatprep.subr.mxu0 %v1191
    %1664 = vmatpush1.xpose.msra.mxu0 %v1189
    %1665 = vmatprep.subr.mxu0 0.0
    %1666 = vmatpush1.xpose.msra.mxu0 0.0
    %1667 = vmatprep.subr.mxu0 0.0
    %1668 = vmatpush1.xpose.msra.mxu0 0.0
    %1669 = vmatprep.subr.mxu0 0.0
    %1670 = vmatpush1.xpose.msra.mxu0 0.0
    %1671 = vmatprep.subr.mxu0 0.0
    %1672 = vmatpush1.xpose.msra.mxu0 0.0
    %1673 = vmatprep.subr.mxu0 0.0
    %1674 = vmatpush1.xpose.msra.mxu0 0.0
    %1675 = vmatprep.subr.mxu0 0.0
    %1676 = vmatpush1.xpose.msra.mxu0 0.0
    %1677 = vmatprep.subr.mxu0 0.0
    %1678 = vmatpush1.xpose.msra.mxu0 0.0
    %1679 = vmatprep.subr.mxu0 0.0
    %1680 = vmatpush1.xpose.msra.mxu0 0.0
    %1681 = vmatprep.subr.mxu0 0.0
    %1682 = vmatpush1.xpose.msra.mxu0 0.0
    %1683 = vmatprep.subr.mxu0 0.0
    %1684 = vmatpush1.xpose.msra.mxu0 0.0
    %1685 = vmatprep.subr.mxu0 0.0
    %1686 = vmatpush1.xpose.msra.mxu0 0.0
    %1687 = vmatprep.subr.mxu0 0.0
    %1688 = vmatpush1.xpose.msra.mxu0 0.0
    %1689 = vmatprep.subr.mxu0 0.0
    %1690 = vmatpush1.xpose.msra.mxu0 0.0
    %1691 = vmatprep.subr.mxu0 0.0
    %1692 = vmatpush1.xpose.msra.mxu0 0.0
    %1693 = vmatprep.subr.mxu0 0.0
    %1694 = vmatpush1.xpose.msra.mxu0 0.0
    %1695 = vmatprep.subr.mxu0 0.0
    %1696 = vmatpush1.xpose.msra.mxu0 0.0
    %1697 = vmatprep.subr.mxu0 0.0
    %1698 = vmatpush1.xpose.msra.mxu0 0.0
    %1699 = vmatprep.subr.mxu0 0.0
    %1700 = vmatpush1.xpose.msra.mxu0 0.0
    %1701 = vmatprep.subr.mxu0 0.0
    %1702 = vmatpush1.xpose.msra.mxu0 0.0
    %1703 = vmatprep.subr.mxu0 0.0
    %1704 = vmatpush1.xpose.msra.mxu0 0.0
    %1705 = vmatprep.subr.mxu0 0.0
    %1706 = vmatpush1.xpose.msra.mxu0 0.0
    %1707 = vmatprep.subr.mxu0 0.0
    %1708 = vmatpush1.xpose.msra.mxu0 0.0
    %1709 = vmatprep.subr.mxu0 0.0
    %1710 = vmatpush1.xpose.msra.mxu0 0.0
    %1711 = vmatprep.subr.mxu0 0.0
    %1712 = vmatpush1.xpose.msra.mxu0 0.0
    %1713 = vmatprep.subr.mxu0 0.0
    %1714 = vmatpush1.xpose.msra.mxu0 0.0
    %1715 = vmatprep.subr.mxu0 0.0
    %1716 = vmatpush1.xpose.msra.mxu0 0.0
    %1717 = vmatprep.subr.mxu0 0.0
    %1718 = vmatpush1.xpose.msra.mxu0 0.0
    %1719 = vmatprep.subr.mxu0 0.0
    %1720 = vmatpush1.xpose.msra.mxu0 0.0
    %1721 = vmatprep.subr.mxu0 0.0
    %1722 = vmatpush1.xpose.msra.mxu0 0.0
    %1723 = vmatprep.subr.mxu0 0.0
    %1724 = vmatpush1.xpose.msra.mxu0 0.0
    %1725 = vmatprep.mubr.f32.mxu0 %v50
    %1726 = vmatmul.mubr.f32.gmra.mrb[0].mxu0 %v49
    %v1727 = vpop.f32.mrb[0].mxu0
    %v1728 = vadd.f32 %v1653, %v1727
    %v1729 = vpop.f32.mrb[0].mxu0
    %1730 = vmatprep.mubr.f32.mxu0 %v58
    %1731 = vmatmul.mubr.f32.gmra.mrb[0].mxu0 %v57
    %v1732 = vpop.f32.mrb[0].mxu0
    %v1733 = vadd.f32 %v1658, %v1732
    %v1734 = vpop.f32.mrb[0].mxu0
    %1735 = vdwg.mxu0
    %1736 = vmatprep.subr.mxu0 %v1230
    %1737 = vmatpush1.xpose.msra.mxu0 %v1228
    %1738 = vmatprep.subr.mxu0 %v1234
    %1739 = vmatpush1.xpose.msra.mxu0 %v1232
    %1740 = vmatprep.subr.mxu0 0.0
    %1741 = vmatpush1.xpose.msra.mxu0 0.0
    %1742 = vmatprep.subr.mxu0 0.0
    %1743 = vmatpush1.xpose.msra.mxu0 0.0
    %1744 = vmatprep.subr.mxu0 0.0
    %1745 = vmatpush1.xpose.msra.mxu0 0.0
    %1746 = vmatprep.subr.mxu0 0.0
    %1747 = vmatpush1.xpose.msra.mxu0 0.0
    %1748 = vmatprep.subr.mxu0 0.0
    %1749 = vmatpush1.xpose.msra.mxu0 0.0
    %1750 = vmatprep.subr.mxu0 0.0
    %1751 = vmatpush1.xpose.msra.mxu0 0.0
    %1752 = vmatprep.subr.mxu0 0.0
    %1753 = vmatpush1.xpose.msra.mxu0 0.0
    %1754 = vmatprep.subr.mxu0 0.0
    %1755 = vmatpush1.xpose.msra.mxu0 0.0
    %1756 = vmatprep.subr.mxu0 0.0
    %1757 = vmatpush1.xpose.msra.mxu0 0.0
    %1758 = vmatprep.subr.mxu0 0.0
    %1759 = vmatpush1.xpose.msra.mxu0 0.0
    %1760 = vmatprep.subr.mxu0 0.0
    %1761 = vmatpush1.xpose.msra.mxu0 0.0
    %1762 = vmatprep.subr.mxu0 0.0
    %1763 = vmatpush1.xpose.msra.mxu0 0.0
    %1764 = vmatprep.subr.mxu0 0.0
    %1765 = vmatpush1.xpose.msra.mxu0 0.0
    %1766 = vmatprep.subr.mxu0 0.0
    %1767 = vmatpush1.xpose.msra.mxu0 0.0
    %1768 = vmatprep.subr.mxu0 0.0
    %1769 = vmatpush1.xpose.msra.mxu0 0.0
    %1770 = vmatprep.subr.mxu0 0.0
    %1771 = vmatpush1.xpose.msra.mxu0 0.0
    %1772 = vmatprep.subr.mxu0 0.0
    %1773 = vmatpush1.xpose.msra.mxu0 0.0
    %1774 = vmatprep.subr.mxu0 0.0
    %1775 = vmatpush1.xpose.msra.mxu0 0.0
    %1776 = vmatprep.subr.mxu0 0.0
    %1777 = vmatpush1.xpose.msra.mxu0 0.0
    %1778 = vmatprep.subr.mxu0 0.0
    %1779 = vmatpush1.xpose.msra.mxu0 0.0
    %1780 = vmatprep.subr.mxu0 0.0
    %1781 = vmatpush1.xpose.msra.mxu0 0.0
    %1782 = vmatprep.subr.mxu0 0.0
    %1783 = vmatpush1.xpose.msra.mxu0 0.0
    %1784 = vmatprep.subr.mxu0 0.0
    %1785 = vmatpush1.xpose.msra.mxu0 0.0
    %1786 = vmatprep.subr.mxu0 0.0
    %1787 = vmatpush1.xpose.msra.mxu0 0.0
    %1788 = vmatprep.subr.mxu0 0.0
    %1789 = vmatpush1.xpose.msra.mxu0 0.0
    %1790 = vmatprep.subr.mxu0 0.0
    %1791 = vmatpush1.xpose.msra.mxu0 0.0
    %1792 = vmatprep.subr.mxu0 0.0
    %1793 = vmatpush1.xpose.msra.mxu0 0.0
    %1794 = vmatprep.subr.mxu0 0.0
    %1795 = vmatpush1.xpose.msra.mxu0 0.0
    %1796 = vmatprep.subr.mxu0 0.0
    %1797 = vmatpush1.xpose.msra.mxu0 0.0
    %1798 = vmatprep.subr.mxu0 0.0
    %1799 = vmatpush1.xpose.msra.mxu0 0.0
    %1800 = vmatprep.mubr.f32.mxu0 %v52
    %1801 = vmatmul.mubr.f32.gmra.mrb[0].mxu0 %v51
    %v1802 = vpop.f32.mrb[0].mxu0
    %v1803 = vadd.f32 %v1728, %v1802
    %v1804 = vpop.f32.mrb[0].mxu0
    %1805 = vmatprep.mubr.f32.mxu0 %v60
    %1806 = vmatmul.mubr.f32.gmra.mrb[0].mxu0 %v59
    %v1807 = vpop.f32.mrb[0].mxu0
    %v1808 = vadd.f32 %v1733, %v1807
    %v1809 = vpop.f32.mrb[0].mxu0
    %1810 = vdwg.mxu0
    %1811 = vxpose.xlu0.b32.start [1/16] %v1406, 128
    %1812 = vxpose.xlu0.b32.cont [2/16] %v1415, 128
    %1813 = vxpose.xlu0.b32.cont [3/16] 0.0, 128
    %1814 = vxpose.xlu0.b32.cont [4/16] 0.0, 128
    %1815 = vxpose.xlu0.b32.cont [5/16] 0.0, 128
    %1816 = vxpose.xlu0.b32.cont [6/16] 0.0, 128
    %1817 = vxpose.xlu0.b32.cont [7/16] 0.0, 128
    %1818 = vxpose.xlu0.b32.cont [8/16] 0.0, 128
    %1819 = vxpose.xlu0.b32.cont [9/16] 0.0, 128
    %1820 = vxpose.xlu0.b32.cont [10/16] 0.0, 128
    %1821 = vxpose.xlu0.b32.cont [11/16] 0.0, 128
    %1822 = vxpose.xlu0.b32.cont [12/16] 0.0, 128
    %1823 = vxpose.xlu0.b32.cont [13/16] 0.0, 128
    %1824 = vxpose.xlu0.b32.cont [14/16] 0.0, 128
    %1825 = vxpose.xlu0.b32.cont [15/16] 0.0, 128
    %1826 = vxpose.xlu0.b32.end [16/16] 0.0, 128
    %v1827 = vpop.trf.xlu0
    %v1828 = vpop.trf.xlu0
    %v1829 = vpop.trf.xlu0
    %v1830 = vpop.trf.xlu0
    %v1831 = vpop.trf.xlu0
    %v1832 = vpop.trf.xlu0
    %v1833 = vpop.trf.xlu0
    %v1834 = vpop.trf.xlu0
    %v1835 = vpop.trf.xlu0
    %v1836 = vpop.trf.xlu0
    %v1837 = vpop.trf.xlu0
    %v1838 = vpop.trf.xlu0
    %v1839 = vpop.trf.xlu0
    %v1840 = vpop.trf.xlu0
    %v1841 = vpop.trf.xlu0
    %v1842 = vpop.trf.xlu0
    %v1843 = vlaneseq
    %v1844 = vshrl.u32 %v1843, 7
    %v1845 = vsub.s32 0, %v1844
    %v1846 = vrot.slane %v1827, %v1845
    %v1847 = vadd.f32 %v1388, %v1846
    %v1848 = vadd.f32 %v1397, %v1846
    %v1849 = vmul.f32 %v1803, 2.0
    %v1850 = vmul.f32 %v1808, 2.0
    %v1851 = vsub.f32 %v1847, %v1849
    %v1852 = vsub.f32 %v1848, %v1850
    %v1853 = vsub.f32 0.0, %v1851
    %v1854 = vsub.f32 0.0, %v1852
    %v1855 = vmul.f32 %v1853, 0.05
    %v1856 = vmul.f32 %v1854, 0.05
    %v1857 = vlaneseq
    %v1858 = vand.u32 %v1857, 127
    %vm1859 = vcmp.lt.s32.totalorder %v1858, 2
    %v1860 = vsel %vm1859, 1, 0
    %vm1861 = vcmp.eq.s32.totalorder %v1860, 1
    %v1862 = vsel %vm1861, %v1855, -1e+30
    %v1863 = vsel %vm1861, %v1856, -1e+30
    %v1864 = vsel %vm875, %v1862, -inf
    %1865 = vmax.xlane.f32.xlu0 %v1864
    %v1866 = vpop.xlane.xlu0 %1865
    %v1867 = vsel %vm875, %v1863, -inf
    %1868 = vmax.xlane.f32.xlu0 %v1867
    %v1869 = vpop.xlane.xlu0 %1868
    %v1870 = vsub.f32 %v1862, %v1866
    %v1871 = vsub.f32 %v1863, %v1869
    %v1872 = vmul.f32 %v1870, 1.442695
    %v1873 = vpow.pop %v1872
    %v1874 = vmul.f32 %v1871, 1.442695
    %v1875 = vpow.pop %v1874
    %v1876 = vsel %vm875, %v1873, 0.0
    %1877 = vadd.xlane.f32.xlu0 %v1876
    %v1878 = vpop.xlane.xlu0 %1877
    %v1879 = vsel %vm875, %v1875, 0.0
    %1880 = vadd.xlane.f32.xlu0 %v1879
    %v1881 = vpop.xlane.xlu0 %1880
    %v1882 = vlog2.pop %v1878
    %v1883 = vmul.f32 %v1882, 0.6931472
    %v1884 = vlog2.pop %v1881
    %v1885 = vmul.f32 %v1884, 0.6931472
    %v1886 = vadd.f32 %v1866, %v1883
    %v1887 = vadd.f32 %v1869, %v1885
    %v1888 = vmul.f32 %v1886, %v1477
    %v1889 = vmul.f32 %v1887, %v1478
    %v1890 = vsel %vm1481, %v1888, 0.0
    %v1891 = vsel %vm1481, %v1889, 0.0
    %v1892 = vadd.f32 %v1890, %v1891
    %1893 = vadd.xlane.f32.xlu0 %v1892
    %v1894 = vpop.xlane.xlu0 %1893
    %v1895 = vrot.slane %v1894, 4
    %v1896 = vadd.f32 %v1894, %v1895
    %v1897 = vrot.slane %v1896, 2
    %v1898 = vadd.f32 %v1896, %v1897
    %v1899 = vrot.slane %v1898, 1
    %v1900 = vadd.f32 %v1898, %v1899
    %s1901 = vtos %v1900
    %s1902 = ssub.f32 0.0, %s1901
    %s1903 = smul.f32 %s1902, 0.5
    %s1904 = scalar_lea.smem [#allocation2], 0
    %1905 = sst [smem:[%s1904]] %s1510
    %s1906 = scalar_lea.smem [#allocation2], 1
    %1907 = sst [smem:[%s1906]] %s1494
    %s1908 = scalar_lea.smem [#allocation2], 2
    %1909 = sst [smem:[%s1908]] %s1509
    %s1910 = scalar_lea.smem [#allocation2], 3
    %1911 = sst [smem:[%s1910]] %s1903
    // Predicated region
    $region46: #{tpu_custom_call.1} parent=1 // pred_check
      _
    $region47: #{tpu_custom_call.1} parent=1 // pred_check_branch
      %1913 = sbr.rel (0) target = $region49
    $region48: #{tpu_custom_call.1} parent=1 // pred_region
      %s1915 = ssub.s32 16, 16
      %1916 = vsyncadd [#allocation4], %s1915
      %1919 = dma.smem_to_hbm [#allocation2], 16, %s11, [#allocation4]
    $region49: #{tpu_custom_call.1} parent=1 // pred_fallthru
      _
    // Predicated region
    $region50: #{tpu_custom_call.1} parent=1 // pred_check
      _
    $region51: #{tpu_custom_call.1} parent=1 // pred_check_branch
      %1921 = sbr.rel (0) target = $region53
    $region52: #{tpu_custom_call.1} parent=1 // pred_region
      %s1923 = ssub.s32 2048, 2048
      %1924 = vsyncadd [#allocation3], %s1923
      %s1925 = sshll.u32 [#allocation5], 4
      %s1926 = int_to_ptr.vmem [resolvable:$true] %s1925
      %1931 = dma.vmem_to_hbm [thread:$0]  %s1926, 2048, %s12, [#allocation3], 1024, 1024, 64
    $region53: #{tpu_custom_call.1} parent=1 // pred_fallthru
      _
    // Predicated region
    $region54: #{tpu_custom_call.1} parent=1 // pred_check
      _
    $region55: #{tpu_custom_call.1} parent=1 // pred_check_branch
      %1933 = sbr.rel (0) target = $region57
    $region56: #{tpu_custom_call.1} parent=1 // pred_region
      %s1935 = ssub.s32 2048, 2048
      %1936 = vsyncadd [#allocation7], %s1935
      %s1937 = sshll.u32 [#allocation6], 4
      %s1938 = int_to_ptr.vmem [resolvable:$true] %s1937
      %1943 = dma.vmem_to_hbm [thread:$0]  %s1938, 2048, %s13, [#allocation7], 1024, 1024, 64
    $region57: #{tpu_custom_call.1} parent=1 // pred_fallthru
      _
    // Predicated region
    $region58: #{tpu_custom_call.1} parent=1 // pred_check
      _
    $region59: #{tpu_custom_call.1} parent=1 // pred_check_branch
      %1945 = sbr.rel (0) target = $region61
    $region60: #{tpu_custom_call.1} parent=1 // pred_region
      %1946 = dma.done [#allocation4], 16
    $region61: #{tpu_custom_call.1} parent=1 // pred_fallthru
      _
    // Predicated region
    $region62: #{tpu_custom_call.1} parent=1 // pred_check
      _
    $region63: #{tpu_custom_call.1} parent=1 // pred_check_branch
      %1948 = sbr.rel (0) target = $region65
    $region64: #{tpu_custom_call.1} parent=1 // pred_region
      %1949 = dma.done [#allocation3], 2048
    $region65: #{tpu_custom_call.1} parent=1 // pred_fallthru
      _
    // Predicated region
    $region66: #{tpu_custom_call.1} parent=1 // pred_check
      _
    $region67: #{tpu_custom_call.1} parent=1 // pred_check_branch
      %1951 = sbr.rel (0) target = $region69
    $region68: #{tpu_custom_call.1} parent=1 // pred_region
      %1952 = dma.done [#allocation7], 2048
    $region69: #{tpu_custom_call.1} parent=1 // pred_fallthru
      _
    %1953 = sfence
    %1954 = vsyncpa [#allocation3], 1
    %1955 = vsyncpa [#allocation7], 1
    %1956 = vsyncpa [#allocation4], 1

</llo_original>
